<compile_context>
chip_gen: v6e
topology: v6e:2x2x1
jax: 0.10.0
libtpu: 0.0.40
codegen_flags: <defaults>
</compile_context>

<pallas_src>
import functools

import jax
import jax.numpy as jnp
from jax import lax
from jax.experimental import pallas as pl
from jax.experimental.pallas import tpu as pltpu


# ---------------------------------------------------------------------------
# Fused kernel. Ref layout (scalar-prefetch first, then inputs, out, scratch):
#   tokens(B,T) SMEM,
#   emb(vocab,E) bf16, w_ih0_t(E,H) bf16, w_hh0_t(H,H) bf16, b0(1,H) f32,
#   [w_cat_l(2H,H) bf16, b_l(1,H) f32] * (num_layers-1),
#   w_fc(OUT,T*H) bf16, b_fc(1,OUT) f32,
#   h0_l(B,H) f32 * num_layers,
#   o(B,OUT) f32,
#   proj(vocab,H) f32 VMEM scratch
# ---------------------------------------------------------------------------
def make_fused_rnn_kernel(num_layers, seq_len, batch, hidden, out_dim):
    def kernel(*refs):
        tok_ref = refs[0]                                  # (B, T) int32 SMEM
        emb_ref, wih0_ref, whh0_ref, b0_ref = refs[1:5]
        idx = 5
        wcat_refs, bup_refs = [], []
        for _ in range(num_layers - 1):
            wcat_refs.append(refs[idx])
            bup_refs.append(refs[idx + 1])
            idx += 2
        wfc_ref, bfc_ref = refs[idx], refs[idx + 1]
        idx += 2
        h0_refs = list(refs[idx:idx + num_layers])
        idx += num_layers
        o_ref = refs[idx]
        proj_ref = refs[idx + 1]                           # (vocab, H) f32

        # Prologue: layer-0 projection over the whole (tiny) vocab, bias
        # folded in. One (vocab, E) @ (E, H) bf16 matmul, f32 accumulate.
        proj_ref[...] = (
            jnp.dot(emb_ref[...], wih0_ref[...],
                    preferred_element_type=jnp.float32)
            + b0_ref[...]
        )

        # Loop-invariant operands (a few vregs total; fc weight NOT loaded
        # here -- epilogue only).
        whh0 = whh0_ref[...]                               # (H, H) bf16
        wcat = [r[...] for r in wcat_refs]                 # (2H, H) bf16
        b_up = [jnp.broadcast_to(r[...], (batch, hidden))  # hoisted broadcast
                for r in bup_refs]

        h = [r[...] for r in h0_refs]                      # (B, H) f32 each
        h_top = []                                         # last-layer outputs

        # Fully-unrolled recurrence (latency-bound serial matmul->tanh chain).
        # TODO(synk): a layer-0/layer-1 wavefront skew (block-diagonal matmul
        # per step) would shorten the chain from 2T to T+1 dependent stages.
        for t in range(seq_len):
            # Gather this step's pre-projected inputs: B dynamic row reads
            # from the VMEM scratch, indexed by SMEM token scalars.
            rows = [proj_ref[pl.ds(tok_ref[b, t], 1), :] for b in range(batch)]
            pre_t = jnp.concatenate(rows, axis=0)          # (B, H) f32

            # Layer 0: h = tanh(pre_t + h @ W_hh0^T)   (bias already in pre_t)
            h[0] = jnp.tanh(
                pre_t
                + jnp.dot(h[0].astype(jnp.bfloat16), whh0,
                          preferred_element_type=jnp.float32))

            # Upper layers: one fused matmul per step:
            #   h_l = tanh(concat([h_{l-1}, h_l]) @ [W_ih^T; W_hh^T] + b)
            for l in range(1, num_layers):
                cat = jnp.concatenate([h[l - 1], h[l]], axis=-1)   # (B, 2H) f32
                h[l] = jnp.tanh(
                    jnp.dot(cat.astype(jnp.bfloat16), wcat[l - 1],
                            preferred_element_type=jnp.float32)
                    + b_up[l - 1])

            h_top.append(h[-1])

        # Epilogue: flatten (feature index = t*H + h, matching torch.flatten
        # after permute) and ONE lane-dense fc matmul + tanh.
        h_flat = jnp.concatenate(h_top, axis=-1)           # (B, T*H) f32
        fc = lax.dot_general(
            h_flat.astype(jnp.bfloat16), wfc_ref[...],
            dimension_numbers=(((1,), (1,)), ((), ())),    # flat @ W_fc^T
            preferred_element_type=jnp.float32)            # (B, OUT) f32
        o_ref[...] = jnp.tanh(fc + bfc_ref[...])

    return kernel


def fused_rnn_apply(tokens, params, *, num_layers, seq_len, batch, hidden,
                    out_dim, vocab):
    kernel = make_fused_rnn_kernel(num_layers, seq_len, batch, hidden, out_dim)

    vmem_args = [params["embedding"], params["w_ih0_t"], params["w_hh0_t"],
                 params["b_0"]]
    for l in range(1, num_layers):
        vmem_args += [params[f"w_cat_{l}"], params[f"b_{l}"]]
    vmem_args += [params["w_fc"], params["b_fc"]]
    vmem_args += [params["h0"][l] for l in range(num_layers)]

    grid_spec = pltpu.PrefetchScalarGridSpec(
        num_scalar_prefetch=1,                 # tokens -> SMEM
        grid=(1,),                             # whole problem in one step
        in_specs=[pl.BlockSpec(a.shape, lambda i, tok: (0, 0))
                  for a in vmem_args],
        out_specs=pl.BlockSpec((batch, out_dim), lambda i, tok: (0, 0)),
        scratch_shapes=[pltpu.VMEM((vocab, hidden), jnp.float32)],
    )
    # NOTE(v7x): at realistic batch sizes add a leading "parallel" grid axis
    # over batch so both TensorCores are used; at B=2 it is not worth it.
    return pl.pallas_call(
        kernel,
        out_shape=jax.ShapeDtypeStruct((batch, out_dim), jnp.float32),
        grid_spec=grid_spec,
        compiler_params=pltpu.CompilerParams(
            dimension_semantics=("arbitrary",)),
    )(tokens, *vmem_args)


# ---------------------------------------------------------------------------
# Parameter init (matches nn.Embedding / nn.RNN / nn.Linear initializers).
# Matmul operands stored bf16 pre-transposed / pre-fused; biases f32.
# ---------------------------------------------------------------------------
def init_params(key, seq_len, embedding_dim, hidden_size, num_layers, batch,
                out_dim=10):
    keys = jax.random.split(key, 4 * num_layers + 4)
    ki = iter(range(len(keys)))
    params = {}

    # nn.Embedding(seq_len, embedding_dim): N(0, 1)
    params["embedding"] = jax.random.normal(
        keys[next(ki)], (seq_len, embedding_dim), jnp.float32
    ).astype(jnp.bfloat16)

    # nn.RNN: U(-1/sqrt(H), 1/sqrt(H))
    k = 1.0 / jnp.sqrt(jnp.float32(hidden_size))
    for layer in range(num_layers):
        d_in = embedding_dim if layer == 0 else hidden_size
        w_ih = jax.random.uniform(keys[next(ki)], (hidden_size, d_in),
                                  jnp.float32, -k, k)
        w_hh = jax.random.uniform(keys[next(ki)], (hidden_size, hidden_size),
                                  jnp.float32, -k, k)
        b_ih = jax.random.uniform(keys[next(ki)], (hidden_size,), jnp.float32,
                                  -k, k)
        b_hh = jax.random.uniform(keys[next(ki)], (hidden_size,), jnp.float32,
                                  -k, k)
        b = (b_ih + b_hh).reshape(1, hidden_size)          # pre-summed, f32
        if layer == 0:
            params["w_ih0_t"] = w_ih.T.astype(jnp.bfloat16)     # (E, H)
            params["w_hh0_t"] = w_hh.T.astype(jnp.bfloat16)     # (H, H)
            params["b_0"] = b
        else:
            # fused [W_ih^T; W_hh^T]: one matmul per upper-layer step
            params[f"w_cat_{layer}"] = jnp.concatenate(
                [w_ih.T, w_hh.T], axis=0).astype(jnp.bfloat16)  # (2H, H)
            params[f"b_{layer}"] = b

    # nn.Linear(seq_len*hidden, 10): U(-1/sqrt(fan_in), 1/sqrt(fan_in))
    # Kept in the lane-dense PyTorch layout (OUT, T*H); contracted on dim 1.
    fan_in = seq_len * hidden_size
    kf = 1.0 / jnp.sqrt(jnp.float32(fan_in))
    params["w_fc"] = jax.random.uniform(
        keys[next(ki)], (out_dim, fan_in), jnp.float32, -kf, kf
    ).astype(jnp.bfloat16)
    params["b_fc"] = jax.random.uniform(
        keys[next(ki)], (out_dim,), jnp.float32, -kf, kf).reshape(1, out_dim)

    # TODO(synk): the PyTorch module draws h0 = torch.randn(...) inside every
    # forward; reproduced deterministically here with a fixed key.
    params["h0"] = jax.random.normal(
        keys[next(ki)], (num_layers, batch, hidden_size), jnp.float32)
    return params


# ---------------------------------------------------------------------------
# Full forward: everything (gather included) in one Pallas kernel.
# ---------------------------------------------------------------------------
@functools.partial(jax.jit, static_argnames=("num_layers", "out_dim"))
def rnn_forward(tokens, params, num_layers, out_dim=10):
    B, T = tokens.shape
    H = params["w_hh0_t"].shape[0]
    vocab = params["embedding"].shape[0]
    return fused_rnn_apply(tokens, params, num_layers=num_layers, seq_len=T,
                           batch=B, hidden=H, out_dim=out_dim, vocab=vocab)


# Pure-JAX reference with identical math & precision choices (no Pallas).
def rnn_forward_ref(tokens, params, num_layers, out_dim=10):
    B, T = tokens.shape
    proj = jnp.dot(params["embedding"], params["w_ih0_t"],
                   preferred_element_type=jnp.float32) + params["b_0"]
    h = [params["h0"][l] for l in range(num_layers)]
    h_top = []
    for t in range(T):
        pre_t = proj[tokens[:, t]]                         # (B, H)
        h[0] = jnp.tanh(pre_t + jnp.dot(h[0].astype(jnp.bfloat16),
                                        params["w_hh0_t"],
                                        preferred_element_type=jnp.float32))
        for l in range(1, num_layers):
            cat = jnp.concatenate([h[l - 1], h[l]], axis=-1)
            h[l] = jnp.tanh(jnp.dot(cat.astype(jnp.bfloat16),
                                    params[f"w_cat_{l}"],
                                    preferred_element_type=jnp.float32)
                            + params[f"b_{l}"])
        h_top.append(h[-1])
    h_flat = jnp.concatenate(h_top, axis=-1)
    fc = lax.dot_general(h_flat.astype(jnp.bfloat16), params["w_fc"],
                         dimension_numbers=(((1,), (1,)), ((), ())),
                         preferred_element_type=jnp.float32)
    return jnp.tanh(fc + params["b_fc"])


if __name__ == "__main__":
    SEQ_LEN = 8
    EMBEDDING_DIM = 64
    HIDDEN_SIZE = 32
    NUM_LAYERS = 2
    BATCH = 2
    OUT_DIM = 10

    key = jax.random.PRNGKey(0)
    k_tok, k_par = jax.random.split(key)

    # vocab size == seq_len in the original module, so indices in [0, SEQ_LEN)
    tokens = jax.random.randint(k_tok, (BATCH, SEQ_LEN), 0, SEQ_LEN, jnp.int32)
    params = init_params(k_par, SEQ_LEN, EMBEDDING_DIM, HIDDEN_SIZE,
                         NUM_LAYERS, BATCH, OUT_DIM)

    out = rnn_forward(tokens, params, NUM_LAYERS, OUT_DIM)
    out = jax.block_until_ready(out)

    assert out.shape == (BATCH, OUT_DIM), out.shape
    assert out.dtype == jnp.float32
    assert bool(jnp.all(jnp.isfinite(out)))

    ref = jax.block_until_ready(
        rnn_forward_ref(tokens, params, NUM_LAYERS, OUT_DIM))
    assert bool(jnp.allclose(out, ref, atol=1e-2, rtol=1e-2)), (out, ref)

    print("KERNEL_OK")
</pallas_src>

<mosaic_0001>
module attributes {stable_mosaic.version = 11 : i64} {
  func.func @kernel(%arg0: i32, %arg1: memref<2x8xi32, #tpu.memory_space<smem>>, %arg2: memref<8x64xbf16, #tpu.memory_space<vmem>>, %arg3: memref<64x32xbf16, #tpu.memory_space<vmem>>, %arg4: memref<32x32xbf16, #tpu.memory_space<vmem>>, %arg5: memref<1x32xf32, #tpu.memory_space<vmem>>, %arg6: memref<64x32xbf16, #tpu.memory_space<vmem>>, %arg7: memref<1x32xf32, #tpu.memory_space<vmem>>, %arg8: memref<10x256xbf16, #tpu.memory_space<vmem>>, %arg9: memref<1x10xf32, #tpu.memory_space<vmem>>, %arg10: memref<2x32xf32, #tpu.memory_space<vmem>>, %arg11: memref<2x32xf32, #tpu.memory_space<vmem>>, %arg12: memref<2x10xf32, #tpu.memory_space<vmem>>, %arg13: memref<8x32xf32, #tpu.memory_space<vmem>>) attributes {dimension_semantics = [#tpu.dimension_semantics<arbitrary>], iteration_bounds = array<i64: 1>, scalar_prefetch = 1 : i64, scratch_operands = 1 : i64, tpu.core_type = #tpu.core_type<tc>, window_params = [{pipeline_mode = #tpu.pipeline_mode<synchronous>, transform_indices = @transform_0, window_bounds = array<i64: 8, 64>}, {pipeline_mode = #tpu.pipeline_mode<synchronous>, transform_indices = @transform_1, window_bounds = array<i64: 64, 32>}, {pipeline_mode = #tpu.pipeline_mode<synchronous>, transform_indices = @transform_2, window_bounds = array<i64: 32, 32>}, {pipeline_mode = #tpu.pipeline_mode<synchronous>, transform_indices = @transform_3, window_bounds = array<i64: 1, 32>}, {pipeline_mode = #tpu.pipeline_mode<synchronous>, transform_indices = @transform_4, window_bounds = array<i64: 64, 32>}, {pipeline_mode = #tpu.pipeline_mode<synchronous>, transform_indices = @transform_5, window_bounds = array<i64: 1, 32>}, {pipeline_mode = #tpu.pipeline_mode<synchronous>, transform_indices = @transform_6, window_bounds = array<i64: 10, 256>}, {pipeline_mode = #tpu.pipeline_mode<synchronous>, transform_indices = @transform_7, window_bounds = array<i64: 1, 10>}, {pipeline_mode = #tpu.pipeline_mode<synchronous>, transform_indices = @transform_8, window_bounds = array<i64: 2, 32>}, {pipeline_mode = #tpu.pipeline_mode<synchronous>, transform_indices = @transform_9, window_bounds = array<i64: 2, 32>}, {pipeline_mode = #tpu.pipeline_mode<synchronous>, transform_indices = @transform_10, window_bounds = array<i64: 2, 10>}]} {
    %c0 = arith.constant 0 : index
    %c0_0 = arith.constant 0 : index
    %0 = vector.load %arg2[%c0, %c0_0] : memref<8x64xbf16, #tpu.memory_space<vmem>>, vector<8x64xbf16>
    %c0_1 = arith.constant 0 : index
    %c0_2 = arith.constant 0 : index
    %1 = vector.load %arg3[%c0_1, %c0_2] : memref<64x32xbf16, #tpu.memory_space<vmem>>, vector<64x32xbf16>
    %cst = arith.constant dense<0.000000e+00> : vector<8x32xf32>
    %2 = tpu.matmul %0, %1, %cst {dimension_numbers = #tpu.dot_dimension_numbers<[1], [0], [0], [1], [0, 0, 1, 1], [], []>} : vector<8x64xbf16>, vector<64x32xbf16>, vector<8x32xf32> -> vector<8x32xf32>
    %c0_3 = arith.constant 0 : index
    %c0_4 = arith.constant 0 : index
    %3 = vector.load %arg5[%c0_3, %c0_4] : memref<1x32xf32, #tpu.memory_space<vmem>>, vector<1x32xf32>
    %4 = vector.broadcast %3 : vector<1x32xf32> to vector<8x32xf32>
    %5 = arith.addf %2, %4 : vector<8x32xf32>
    %c0_5 = arith.constant 0 : index
    %c0_6 = arith.constant 0 : index
    %6 = vector.load %arg13[%c0_5, %c0_6] : memref<8x32xf32, #tpu.memory_space<vmem>>, vector<8x32xf32>
    tpu.vector_store %arg13[%c0_5, %c0_6], %5 {strides = array<i32>} : memref<8x32xf32, #tpu.memory_space<vmem>>, vector<8x32xf32>,
    %c0_7 = arith.constant 0 : index
    %c0_8 = arith.constant 0 : index
    %7 = vector.load %arg4[%c0_7, %c0_8] : memref<32x32xbf16, #tpu.memory_space<vmem>>, vector<32x32xbf16>
    %c0_9 = arith.constant 0 : index
    %c0_10 = arith.constant 0 : index
    %8 = vector.load %arg6[%c0_9, %c0_10] : memref<64x32xbf16, #tpu.memory_space<vmem>>, vector<64x32xbf16>
    %c0_11 = arith.constant 0 : index
    %c0_12 = arith.constant 0 : index
    %9 = vector.load %arg7[%c0_11, %c0_12] : memref<1x32xf32, #tpu.memory_space<vmem>>, vector<1x32xf32>
    %10 = vector.shape_cast %9 : vector<1x32xf32> to vector<1x32xf32>
    %11 = vector.broadcast %10 : vector<1x32xf32> to vector<2x32xf32>
    %c0_13 = arith.constant 0 : index
    %c0_14 = arith.constant 0 : index
    %12 = vector.load %arg10[%c0_13, %c0_14] : memref<2x32xf32, #tpu.memory_space<vmem>>, vector<2x32xf32>
    %c0_15 = arith.constant 0 : index
    %c0_16 = arith.constant 0 : index
    %13 = vector.load %arg11[%c0_15, %c0_16] : memref<2x32xf32, #tpu.memory_space<vmem>>, vector<2x32xf32>
    %c0_17 = arith.constant 0 : index
    %c0_18 = arith.constant 0 : index
    %14 = memref.load %arg1[%c0_17, %c0_18] : memref<2x8xi32, #tpu.memory_space<smem>>
    %15 = arith.index_cast %14 : i32 to index
    %c0_19 = arith.constant 0 : index
    %16 = vector.load %arg13[%15, %c0_19] : memref<8x32xf32, #tpu.memory_space<vmem>>, vector<1x32xf32>
    %c1 = arith.constant 1 : index
    %c0_20 = arith.constant 0 : index
    %17 = memref.load %arg1[%c1, %c0_20] : memref<2x8xi32, #tpu.memory_space<smem>>
    %18 = arith.index_cast %17 : i32 to index
    %c0_21 = arith.constant 0 : index
    %19 = vector.load %arg13[%18, %c0_21] : memref<8x32xf32, #tpu.memory_space<vmem>>, vector<1x32xf32>
    %20 = tpu.concatenate %16, %19 in 0 : vector<1x32xf32>, vector<1x32xf32> -> vector<2x32xf32>
    %21 = arith.truncf %12 : vector<2x32xf32> to vector<2x32xbf16>
    %cst_22 = arith.constant dense<0.000000e+00> : vector<2x32xf32>
    %22 = tpu.matmul %21, %7, %cst_22 {dimension_numbers = #tpu.dot_dimension_numbers<[1], [0], [0], [1], [0, 0, 1, 1], [], []>} : vector<2x32xbf16>, vector<32x32xbf16>, vector<2x32xf32> -> vector<2x32xf32>
    %23 = arith.addf %20, %22 : vector<2x32xf32>
    %24 = math.tanh %23 : vector<2x32xf32>
    %25 = tpu.concatenate %24, %13 in 1 : vector<2x32xf32>, vector<2x32xf32> -> vector<2x64xf32>
    %26 = arith.truncf %25 : vector<2x64xf32> to vector<2x64xbf16>
    %cst_23 = arith.constant dense<0.000000e+00> : vector<2x32xf32>
    %27 = tpu.matmul %26, %8, %cst_23 {dimension_numbers = #tpu.dot_dimension_numbers<[1], [0], [0], [1], [0, 0, 1, 1], [], []>} : vector<2x64xbf16>, vector<64x32xbf16>, vector<2x32xf32> -> vector<2x32xf32>
    %28 = arith.addf %27, %11 : vector<2x32xf32>
    %29 = math.tanh %28 : vector<2x32xf32>
    %c0_24 = arith.constant 0 : index
    %c1_25 = arith.constant 1 : index
    %30 = memref.load %arg1[%c0_24, %c1_25] : memref<2x8xi32, #tpu.memory_space<smem>>
    %31 = arith.index_cast %30 : i32 to index
    %c0_26 = arith.constant 0 : index
    %32 = vector.load %arg13[%31, %c0_26] : memref<8x32xf32, #tpu.memory_space<vmem>>, vector<1x32xf32>
    %c1_27 = arith.constant 1 : index
    %c1_28 = arith.constant 1 : index
    %33 = memref.load %arg1[%c1_27, %c1_28] : memref<2x8xi32, #tpu.memory_space<smem>>
    %34 = arith.index_cast %33 : i32 to index
    %c0_29 = arith.constant 0 : index
    %35 = vector.load %arg13[%34, %c0_29] : memref<8x32xf32, #tpu.memory_space<vmem>>, vector<1x32xf32>
    %36 = tpu.concatenate %32, %35 in 0 : vector<1x32xf32>, vector<1x32xf32> -> vector<2x32xf32>
    %37 = arith.truncf %24 : vector<2x32xf32> to vector<2x32xbf16>
    %cst_30 = arith.constant dense<0.000000e+00> : vector<2x32xf32>
    %38 = tpu.matmul %37, %7, %cst_30 {dimension_numbers = #tpu.dot_dimension_numbers<[1], [0], [0], [1], [0, 0, 1, 1], [], []>} : vector<2x32xbf16>, vector<32x32xbf16>, vector<2x32xf32> -> vector<2x32xf32>
    %39 = arith.addf %36, %38 : vector<2x32xf32>
    %40 = math.tanh %39 : vector<2x32xf32>
    %41 = tpu.concatenate %40, %29 in 1 : vector<2x32xf32>, vector<2x32xf32> -> vector<2x64xf32>
    %42 = arith.truncf %41 : vector<2x64xf32> to vector<2x64xbf16>
    %cst_31 = arith.constant dense<0.000000e+00> : vector<2x32xf32>
    %43 = tpu.matmul %42, %8, %cst_31 {dimension_numbers = #tpu.dot_dimension_numbers<[1], [0], [0], [1], [0, 0, 1, 1], [], []>} : vector<2x64xbf16>, vector<64x32xbf16>, vector<2x32xf32> -> vector<2x32xf32>
    %44 = arith.addf %43, %11 : vector<2x32xf32>
    %45 = math.tanh %44 : vector<2x32xf32>
    %c0_32 = arith.constant 0 : index
    %c2 = arith.constant 2 : index
    %46 = memref.load %arg1[%c0_32, %c2] : memref<2x8xi32, #tpu.memory_space<smem>>
    %47 = arith.index_cast %46 : i32 to index
    %c0_33 = arith.constant 0 : index
    %48 = vector.load %arg13[%47, %c0_33] : memref<8x32xf32, #tpu.memory_space<vmem>>, vector<1x32xf32>
    %c1_34 = arith.constant 1 : index
    %c2_35 = arith.constant 2 : index
    %49 = memref.load %arg1[%c1_34, %c2_35] : memref<2x8xi32, #tpu.memory_space<smem>>
    %50 = arith.index_cast %49 : i32 to index
    %c0_36 = arith.constant 0 : index
    %51 = vector.load %arg13[%50, %c0_36] : memref<8x32xf32, #tpu.memory_space<vmem>>, vector<1x32xf32>
    %52 = tpu.concatenate %48, %51 in 0 : vector<1x32xf32>, vector<1x32xf32> -> vector<2x32xf32>
    %53 = arith.truncf %40 : vector<2x32xf32> to vector<2x32xbf16>
    %cst_37 = arith.constant dense<0.000000e+00> : vector<2x32xf32>
    %54 = tpu.matmul %53, %7, %cst_37 {dimension_numbers = #tpu.dot_dimension_numbers<[1], [0], [0], [1], [0, 0, 1, 1], [], []>} : vector<2x32xbf16>, vector<32x32xbf16>, vector<2x32xf32> -> vector<2x32xf32>
    %55 = arith.addf %52, %54 : vector<2x32xf32>
    %56 = math.tanh %55 : vector<2x32xf32>
    %57 = tpu.concatenate %56, %45 in 1 : vector<2x32xf32>, vector<2x32xf32> -> vector<2x64xf32>
    %58 = arith.truncf %57 : vector<2x64xf32> to vector<2x64xbf16>
    %cst_38 = arith.constant dense<0.000000e+00> : vector<2x32xf32>
    %59 = tpu.matmul %58, %8, %cst_38 {dimension_numbers = #tpu.dot_dimension_numbers<[1], [0], [0], [1], [0, 0, 1, 1], [], []>} : vector<2x64xbf16>, vector<64x32xbf16>, vector<2x32xf32> -> vector<2x32xf32>
    %60 = arith.addf %59, %11 : vector<2x32xf32>
    %61 = math.tanh %60 : vector<2x32xf32>
    %c0_39 = arith.constant 0 : index
    %c3 = arith.constant 3 : index
    %62 = memref.load %arg1[%c0_39, %c3] : memref<2x8xi32, #tpu.memory_space<smem>>
    %63 = arith.index_cast %62 : i32 to index
    %c0_40 = arith.constant 0 : index
    %64 = vector.load %arg13[%63, %c0_40] : memref<8x32xf32, #tpu.memory_space<vmem>>, vector<1x32xf32>
    %c1_41 = arith.constant 1 : index
    %c3_42 = arith.constant 3 : index
    %65 = memref.load %arg1[%c1_41, %c3_42] : memref<2x8xi32, #tpu.memory_space<smem>>
    %66 = arith.index_cast %65 : i32 to index
    %c0_43 = arith.constant 0 : index
    %67 = vector.load %arg13[%66, %c0_43] : memref<8x32xf32, #tpu.memory_space<vmem>>, vector<1x32xf32>
    %68 = tpu.concatenate %64, %67 in 0 : vector<1x32xf32>, vector<1x32xf32> -> vector<2x32xf32>
    %69 = arith.truncf %56 : vector<2x32xf32> to vector<2x32xbf16>
    %cst_44 = arith.constant dense<0.000000e+00> : vector<2x32xf32>
    %70 = tpu.matmul %69, %7, %cst_44 {dimension_numbers = #tpu.dot_dimension_numbers<[1], [0], [0], [1], [0, 0, 1, 1], [], []>} : vector<2x32xbf16>, vector<32x32xbf16>, vector<2x32xf32> -> vector<2x32xf32>
    %71 = arith.addf %68, %70 : vector<2x32xf32>
    %72 = math.tanh %71 : vector<2x32xf32>
    %73 = tpu.concatenate %72, %61 in 1 : vector<2x32xf32>, vector<2x32xf32> -> vector<2x64xf32>
    %74 = arith.truncf %73 : vector<2x64xf32> to vector<2x64xbf16>
    %cst_45 = arith.constant dense<0.000000e+00> : vector<2x32xf32>
    %75 = tpu.matmul %74, %8, %cst_45 {dimension_numbers = #tpu.dot_dimension_numbers<[1], [0], [0], [1], [0, 0, 1, 1], [], []>} : vector<2x64xbf16>, vector<64x32xbf16>, vector<2x32xf32> -> vector<2x32xf32>
    %76 = arith.addf %75, %11 : vector<2x32xf32>
    %77 = math.tanh %76 : vector<2x32xf32>
    %c0_46 = arith.constant 0 : index
    %c4 = arith.constant 4 : index
    %78 = memref.load %arg1[%c0_46, %c4] : memref<2x8xi32, #tpu.memory_space<smem>>
    %79 = arith.index_cast %78 : i32 to index
    %c0_47 = arith.constant 0 : index
    %80 = vector.load %arg13[%79, %c0_47] : memref<8x32xf32, #tpu.memory_space<vmem>>, vector<1x32xf32>
    %c1_48 = arith.constant 1 : index
    %c4_49 = arith.constant 4 : index
    %81 = memref.load %arg1[%c1_48, %c4_49] : memref<2x8xi32, #tpu.memory_space<smem>>
    %82 = arith.index_cast %81 : i32 to index
    %c0_50 = arith.constant 0 : index
    %83 = vector.load %arg13[%82, %c0_50] : memref<8x32xf32, #tpu.memory_space<vmem>>, vector<1x32xf32>
    %84 = tpu.concatenate %80, %83 in 0 : vector<1x32xf32>, vector<1x32xf32> -> vector<2x32xf32>
    %85 = arith.truncf %72 : vector<2x32xf32> to vector<2x32xbf16>
    %cst_51 = arith.constant dense<0.000000e+00> : vector<2x32xf32>
    %86 = tpu.matmul %85, %7, %cst_51 {dimension_numbers = #tpu.dot_dimension_numbers<[1], [0], [0], [1], [0, 0, 1, 1], [], []>} : vector<2x32xbf16>, vector<32x32xbf16>, vector<2x32xf32> -> vector<2x32xf32>
    %87 = arith.addf %84, %86 : vector<2x32xf32>
    %88 = math.tanh %87 : vector<2x32xf32>
    %89 = tpu.concatenate %88, %77 in 1 : vector<2x32xf32>, vector<2x32xf32> -> vector<2x64xf32>
    %90 = arith.truncf %89 : vector<2x64xf32> to vector<2x64xbf16>
    %cst_52 = arith.constant dense<0.000000e+00> : vector<2x32xf32>
    %91 = tpu.matmul %90, %8, %cst_52 {dimension_numbers = #tpu.dot_dimension_numbers<[1], [0], [0], [1], [0, 0, 1, 1], [], []>} : vector<2x64xbf16>, vector<64x32xbf16>, vector<2x32xf32> -> vector<2x32xf32>
    %92 = arith.addf %91, %11 : vector<2x32xf32>
    %93 = math.tanh %92 : vector<2x32xf32>
    %c0_53 = arith.constant 0 : index
    %c5 = arith.constant 5 : index
    %94 = memref.load %arg1[%c0_53, %c5] : memref<2x8xi32, #tpu.memory_space<smem>>
    %95 = arith.index_cast %94 : i32 to index
    %c0_54 = arith.constant 0 : index
    %96 = vector.load %arg13[%95, %c0_54] : memref<8x32xf32, #tpu.memory_space<vmem>>, vector<1x32xf32>
    %c1_55 = arith.constant 1 : index
    %c5_56 = arith.constant 5 : index
    %97 = memref.load %arg1[%c1_55, %c5_56] : memref<2x8xi32, #tpu.memory_space<smem>>
    %98 = arith.index_cast %97 : i32 to index
    %c0_57 = arith.constant 0 : index
    %99 = vector.load %arg13[%98, %c0_57] : memref<8x32xf32, #tpu.memory_space<vmem>>, vector<1x32xf32>
    %100 = tpu.concatenate %96, %99 in 0 : vector<1x32xf32>, vector<1x32xf32> -> vector<2x32xf32>
    %101 = arith.truncf %88 : vector<2x32xf32> to vector<2x32xbf16>
    %cst_58 = arith.constant dense<0.000000e+00> : vector<2x32xf32>
    %102 = tpu.matmul %101, %7, %cst_58 {dimension_numbers = #tpu.dot_dimension_numbers<[1], [0], [0], [1], [0, 0, 1, 1], [], []>} : vector<2x32xbf16>, vector<32x32xbf16>, vector<2x32xf32> -> vector<2x32xf32>
    %103 = arith.addf %100, %102 : vector<2x32xf32>
    %104 = math.tanh %103 : vector<2x32xf32>
    %105 = tpu.concatenate %104, %93 in 1 : vector<2x32xf32>, vector<2x32xf32> -> vector<2x64xf32>
    %106 = arith.truncf %105 : vector<2x64xf32> to vector<2x64xbf16>
    %cst_59 = arith.constant dense<0.000000e+00> : vector<2x32xf32>
    %107 = tpu.matmul %106, %8, %cst_59 {dimension_numbers = #tpu.dot_dimension_numbers<[1], [0], [0], [1], [0, 0, 1, 1], [], []>} : vector<2x64xbf16>, vector<64x32xbf16>, vector<2x32xf32> -> vector<2x32xf32>
    %108 = arith.addf %107, %11 : vector<2x32xf32>
    %109 = math.tanh %108 : vector<2x32xf32>
    %c0_60 = arith.constant 0 : index
    %c6 = arith.constant 6 : index
    %110 = memref.load %arg1[%c0_60, %c6] : memref<2x8xi32, #tpu.memory_space<smem>>
    %111 = arith.index_cast %110 : i32 to index
    %c0_61 = arith.constant 0 : index
    %112 = vector.load %arg13[%111, %c0_61] : memref<8x32xf32, #tpu.memory_space<vmem>>, vector<1x32xf32>
    %c1_62 = arith.constant 1 : index
    %c6_63 = arith.constant 6 : index
    %113 = memref.load %arg1[%c1_62, %c6_63] : memref<2x8xi32, #tpu.memory_space<smem>>
    %114 = arith.index_cast %113 : i32 to index
    %c0_64 = arith.constant 0 : index
    %115 = vector.load %arg13[%114, %c0_64] : memref<8x32xf32, #tpu.memory_space<vmem>>, vector<1x32xf32>
    %116 = tpu.concatenate %112, %115 in 0 : vector<1x32xf32>, vector<1x32xf32> -> vector<2x32xf32>
    %117 = arith.truncf %104 : vector<2x32xf32> to vector<2x32xbf16>
    %cst_65 = arith.constant dense<0.000000e+00> : vector<2x32xf32>
    %118 = tpu.matmul %117, %7, %cst_65 {dimension_numbers = #tpu.dot_dimension_numbers<[1], [0], [0], [1], [0, 0, 1, 1], [], []>} : vector<2x32xbf16>, vector<32x32xbf16>, vector<2x32xf32> -> vector<2x32xf32>
    %119 = arith.addf %116, %118 : vector<2x32xf32>
    %120 = math.tanh %119 : vector<2x32xf32>
    %121 = tpu.concatenate %120, %109 in 1 : vector<2x32xf32>, vector<2x32xf32> -> vector<2x64xf32>
    %122 = arith.truncf %121 : vector<2x64xf32> to vector<2x64xbf16>
    %cst_66 = arith.constant dense<0.000000e+00> : vector<2x32xf32>
    %123 = tpu.matmul %122, %8, %cst_66 {dimension_numbers = #tpu.dot_dimension_numbers<[1], [0], [0], [1], [0, 0, 1, 1], [], []>} : vector<2x64xbf16>, vector<64x32xbf16>, vector<2x32xf32> -> vector<2x32xf32>
    %124 = arith.addf %123, %11 : vector<2x32xf32>
    %125 = math.tanh %124 : vector<2x32xf32>
    %c0_67 = arith.constant 0 : index
    %c7 = arith.constant 7 : index
    %126 = memref.load %arg1[%c0_67, %c7] : memref<2x8xi32, #tpu.memory_space<smem>>
    %127 = arith.index_cast %126 : i32 to index
    %c0_68 = arith.constant 0 : index
    %128 = vector.load %arg13[%127, %c0_68] : memref<8x32xf32, #tpu.memory_space<vmem>>, vector<1x32xf32>
    %c1_69 = arith.constant 1 : index
    %c7_70 = arith.constant 7 : index
    %129 = memref.load %arg1[%c1_69, %c7_70] : memref<2x8xi32, #tpu.memory_space<smem>>
    %130 = arith.index_cast %129 : i32 to index
    %c0_71 = arith.constant 0 : index
    %131 = vector.load %arg13[%130, %c0_71] : memref<8x32xf32, #tpu.memory_space<vmem>>, vector<1x32xf32>
    %132 = tpu.concatenate %128, %131 in 0 : vector<1x32xf32>, vector<1x32xf32> -> vector<2x32xf32>
    %133 = arith.truncf %120 : vector<2x32xf32> to vector<2x32xbf16>
    %cst_72 = arith.constant dense<0.000000e+00> : vector<2x32xf32>
    %134 = tpu.matmul %133, %7, %cst_72 {dimension_numbers = #tpu.dot_dimension_numbers<[1], [0], [0], [1], [0, 0, 1, 1], [], []>} : vector<2x32xbf16>, vector<32x32xbf16>, vector<2x32xf32> -> vector<2x32xf32>
    %135 = arith.addf %132, %134 : vector<2x32xf32>
    %136 = math.tanh %135 : vector<2x32xf32>
    %137 = tpu.concatenate %136, %125 in 1 : vector<2x32xf32>, vector<2x32xf32> -> vector<2x64xf32>
    %138 = arith.truncf %137 : vector<2x64xf32> to vector<2x64xbf16>
    %cst_73 = arith.constant dense<0.000000e+00> : vector<2x32xf32>
    %139 = tpu.matmul %138, %8, %cst_73 {dimension_numbers = #tpu.dot_dimension_numbers<[1], [0], [0], [1], [0, 0, 1, 1], [], []>} : vector<2x64xbf16>, vector<64x32xbf16>, vector<2x32xf32> -> vector<2x32xf32>
    %140 = arith.addf %139, %11 : vector<2x32xf32>
    %141 = math.tanh %140 : vector<2x32xf32>
    %142 = tpu.concatenate %29, %45, %61, %77, %93, %109, %125, %141 in 1 : vector<2x32xf32>, vector<2x32xf32>, vector<2x32xf32>, vector<2x32xf32>, vector<2x32xf32>, vector<2x32xf32>, vector<2x32xf32>, vector<2x32xf32> -> vector<2x256xf32>
    %143 = arith.truncf %142 : vector<2x256xf32> to vector<2x256xbf16>
    %c0_74 = arith.constant 0 : index
    %c0_75 = arith.constant 0 : index
    %144 = vector.load %arg8[%c0_74, %c0_75] : memref<10x256xbf16, #tpu.memory_space<vmem>>, vector<10x256xbf16>
    %cst_76 = arith.constant dense<0.000000e+00> : vector<2x10xf32>
    %145 = tpu.matmul %143, %144, %cst_76 {dimension_numbers = #tpu.dot_dimension_numbers<[1], [1], [0], [0], [0, 0, 1, 0], [], []>} : vector<2x256xbf16>, vector<10x256xbf16>, vector<2x10xf32> -> vector<2x10xf32>
    %c0_77 = arith.constant 0 : index
    %c0_78 = arith.constant 0 : index
    %146 = vector.load %arg9[%c0_77, %c0_78] : memref<1x10xf32, #tpu.memory_space<vmem>>, vector<1x10xf32>
    %147 = vector.broadcast %146 : vector<1x10xf32> to vector<2x10xf32>
    %148 = arith.addf %145, %147 : vector<2x10xf32>
    %149 = math.tanh %148 : vector<2x10xf32>
    %c0_79 = arith.constant 0 : index
    %c0_80 = arith.constant 0 : index
    %150 = vector.load %arg12[%c0_79, %c0_80] : memref<2x10xf32, #tpu.memory_space<vmem>>, vector<2x10xf32>
    tpu.vector_store %arg12[%c0_79, %c0_80], %149 {strides = array<i32>} : memref<2x10xf32, #tpu.memory_space<vmem>>, vector<2x10xf32>,
    return
  }
  func.func @transform_0(%arg0: i32, %arg1: memref<2x8xi32, #tpu.memory_space<smem>>) -> (i32, i32) {
    %c0_i32 = arith.constant 0 : i32
    %c0_i32_0 = arith.constant 0 : i32
    %c0_i32_1 = arith.constant 0 : i32
    return %c0_i32, %c0_i32_0 : i32, i32
  }
  func.func @transform_1(%arg0: i32, %arg1: memref<2x8xi32, #tpu.memory_space<smem>>) -> (i32, i32) {
    %c0_i32 = arith.constant 0 : i32
    %c0_i32_0 = arith.constant 0 : i32
    %c0_i32_1 = arith.constant 0 : i32
    return %c0_i32, %c0_i32_0 : i32, i32
  }
  func.func @transform_2(%arg0: i32, %arg1: memref<2x8xi32, #tpu.memory_space<smem>>) -> (i32, i32) {
    %c0_i32 = arith.constant 0 : i32
    %c0_i32_0 = arith.constant 0 : i32
    %c0_i32_1 = arith.constant 0 : i32
    return %c0_i32, %c0_i32_0 : i32, i32
  }
  func.func @transform_3(%arg0: i32, %arg1: memref<2x8xi32, #tpu.memory_space<smem>>) -> (i32, i32) {
    %c0_i32 = arith.constant 0 : i32
    %c0_i32_0 = arith.constant 0 : i32
    %c0_i32_1 = arith.constant 0 : i32
    return %c0_i32, %c0_i32_0 : i32, i32
  }
  func.func @transform_4(%arg0: i32, %arg1: memref<2x8xi32, #tpu.memory_space<smem>>) -> (i32, i32) {
    %c0_i32 = arith.constant 0 : i32
    %c0_i32_0 = arith.constant 0 : i32
    %c0_i32_1 = arith.constant 0 : i32
    return %c0_i32, %c0_i32_0 : i32, i32
  }
  func.func @transform_5(%arg0: i32, %arg1: memref<2x8xi32, #tpu.memory_space<smem>>) -> (i32, i32) {
    %c0_i32 = arith.constant 0 : i32
    %c0_i32_0 = arith.constant 0 : i32
    %c0_i32_1 = arith.constant 0 : i32
    return %c0_i32, %c0_i32_0 : i32, i32
  }
  func.func @transform_6(%arg0: i32, %arg1: memref<2x8xi32, #tpu.memory_space<smem>>) -> (i32, i32) {
    %c0_i32 = arith.constant 0 : i32
    %c0_i32_0 = arith.constant 0 : i32
    %c0_i32_1 = arith.constant 0 : i32
    return %c0_i32, %c0_i32_0 : i32, i32
  }
  func.func @transform_7(%arg0: i32, %arg1: memref<2x8xi32, #tpu.memory_space<smem>>) -> (i32, i32) {
    %c0_i32 = arith.constant 0 : i32
    %c0_i32_0 = arith.constant 0 : i32
    %c0_i32_1 = arith.constant 0 : i32
    return %c0_i32, %c0_i32_0 : i32, i32
  }
  func.func @transform_8(%arg0: i32, %arg1: memref<2x8xi32, #tpu.memory_space<smem>>) -> (i32, i32) {
    %c0_i32 = arith.constant 0 : i32
    %c0_i32_0 = arith.constant 0 : i32
    %c0_i32_1 = arith.constant 0 : i32
    return %c0_i32, %c0_i32_0 : i32, i32
  }
  func.func @transform_9(%arg0: i32, %arg1: memref<2x8xi32, #tpu.memory_space<smem>>) -> (i32, i32) {
    %c0_i32 = arith.constant 0 : i32
    %c0_i32_0 = arith.constant 0 : i32
    %c0_i32_1 = arith.constant 0 : i32
    return %c0_i32, %c0_i32_0 : i32, i32
  }
  func.func @transform_10(%arg0: i32, %arg1: memref<2x8xi32, #tpu.memory_space<smem>>) -> (i32, i32) {
    %c0_i32 = arith.constant 0 : i32
    %c0_i32_0 = arith.constant 0 : i32
    %c0_i32_1 = arith.constant 0 : i32
    return %c0_i32, %c0_i32_0 : i32, i32
  }
}

</mosaic_0001>

<llo_original>
// kernel: rnn_forward.1
$region0: #{rnn_forward.1}
  #allocation0 [shape = 'u32[]', space=smem, size = 0x4, offset = 0x4, fixed_abs, tag = 'smem constant byte address 0x4 - core index']
  #allocation1 [shape = 'u32[144,128]{1,0:T(1,128)}', space=vmem, size = 0x12000, scoped, tag = 'internal scratch']
  #allocation2 [shape = 'f32[8,32]{1,0:T(8,128)}', space=vmem, size = 0x1000, scoped, tag = 'scratch operand']
  #allocation3 [shape = 's32[1]{0}', space=sflag, size = 0x4, scoped, tag = 'scoped memory for rnn_forward.1']
  #allocation4 [shape = 'u8[1024]{0}', space=smem, size = 0x400, scoped, tag = 'prefetched SMEM operand 0']
  %s0 = inlined_call_operand.vmem [shape: s32[2,8], index: 0, kind: input, shape index: {}]
  %s1 = inlined_call_operand.vmem [shape: bf16[8,64], index: 1, kind: input, shape index: {}]
  %s2 = inlined_call_operand.vmem [shape: bf16[64,32], index: 2, kind: input, shape index: {}]
  %s3 = inlined_call_operand.vmem [shape: bf16[32,32], index: 3, kind: input, shape index: {}]
  %s4 = inlined_call_operand.vmem [shape: f32[1,32], index: 4, kind: input, shape index: {}]
  %s5 = inlined_call_operand.vmem [shape: bf16[64,32], index: 5, kind: input, shape index: {}]
  %s6 = inlined_call_operand.vmem [shape: f32[1,32], index: 6, kind: input, shape index: {}]
  %s7 = inlined_call_operand.vmem [shape: bf16[10,256], index: 7, kind: input, shape index: {}]
  %s8 = inlined_call_operand.vmem [shape: f32[1,10], index: 8, kind: input, shape index: {}]
  %s9 = inlined_call_operand.vmem [shape: f32[2,32], index: 9, kind: input, shape index: {}]
  %s10 = inlined_call_operand.vmem [shape: f32[2,32], index: 10, kind: input, shape index: {}]
  %s11 = inlined_call_operand.hbm [shape: f32[2,10], index: 11, kind: output, shape index: {}]
  %s12 = sld [smem:[#allocation0]]
  $region50: #{rnn_forward.1} parent=0
    _
  %s14 = ssub.s32 1, %s12
  %s15 = scalar_select 0, %s14, %s12
  %s16 = sshll.u32 %s0, 4
  %s17 = int_to_ptr.vmem [resolvable:$true] %s16
  %19 = dma.vmem_to_smem %s17, 32, [#allocation4], [#allocation3]
  %20 = dma.done [#allocation3], 32
  %21 = sfence
  $region1: #{rnn_forward.1} parent=0
    #allocation5 [shape = 'u8[1024]{0}', space=vmem, size = 0x400, scoped, tag = 'output window, operand 0, single buffered']
    #allocation6 [shape = 's32[1]{0}', space=sflag, size = 0x4, scoped, tag = 'scoped memory for rnn_forward.1']
    %22 = vsyncpa [#allocation6], 0
    // Predicated region
    $region2: #{rnn_forward.1} parent=1 // pred_check
      _
    $region3: #{rnn_forward.1} parent=1 // pred_check_branch
      %24 = sbr.rel (0) target = $region5
    $region4: #{rnn_forward.1} parent=1 // pred_region
      _
    $region5: #{rnn_forward.1} parent=1 // pred_fallthru
      _
    // Predicated region
    $region6: #{rnn_forward.1} parent=1 // pred_check
      _
    $region7: #{rnn_forward.1} parent=1 // pred_check_branch
      %26 = sbr.rel (0) target = $region9
    $region8: #{rnn_forward.1} parent=1 // pred_region
      _
    $region9: #{rnn_forward.1} parent=1 // pred_fallthru
      _
    // Predicated region
    $region10: #{rnn_forward.1} parent=1 // pred_check
      _
    $region11: #{rnn_forward.1} parent=1 // pred_check_branch
      %28 = sbr.rel (0) target = $region13
    $region12: #{rnn_forward.1} parent=1 // pred_region
      _
    $region13: #{rnn_forward.1} parent=1 // pred_fallthru
      _
    // Predicated region
    $region14: #{rnn_forward.1} parent=1 // pred_check
      _
    $region15: #{rnn_forward.1} parent=1 // pred_check_branch
      %30 = sbr.rel (0) target = $region17
    $region16: #{rnn_forward.1} parent=1 // pred_region
      _
    $region17: #{rnn_forward.1} parent=1 // pred_fallthru
      _
    // Predicated region
    $region18: #{rnn_forward.1} parent=1 // pred_check
      _
    $region19: #{rnn_forward.1} parent=1 // pred_check_branch
      %32 = sbr.rel (0) target = $region21
    $region20: #{rnn_forward.1} parent=1 // pred_region
      _
    $region21: #{rnn_forward.1} parent=1 // pred_fallthru
      _
    // Predicated region
    $region22: #{rnn_forward.1} parent=1 // pred_check
      _
    $region23: #{rnn_forward.1} parent=1 // pred_check_branch
      %34 = sbr.rel (0) target = $region25
    $region24: #{rnn_forward.1} parent=1 // pred_region
      _
    $region25: #{rnn_forward.1} parent=1 // pred_fallthru
      _
    // Predicated region
    $region26: #{rnn_forward.1} parent=1 // pred_check
      _
    $region27: #{rnn_forward.1} parent=1 // pred_check_branch
      %36 = sbr.rel (0) target = $region29
    $region28: #{rnn_forward.1} parent=1 // pred_region
      _
    $region29: #{rnn_forward.1} parent=1 // pred_fallthru
      _
    // Predicated region
    $region30: #{rnn_forward.1} parent=1 // pred_check
      _
    $region31: #{rnn_forward.1} parent=1 // pred_check_branch
      %38 = sbr.rel (0) target = $region33
    $region32: #{rnn_forward.1} parent=1 // pred_region
      _
    $region33: #{rnn_forward.1} parent=1 // pred_fallthru
      _
    // Predicated region
    $region34: #{rnn_forward.1} parent=1 // pred_check
      _
    $region35: #{rnn_forward.1} parent=1 // pred_check_branch
      %40 = sbr.rel (0) target = $region37
    $region36: #{rnn_forward.1} parent=1 // pred_region
      _
    $region37: #{rnn_forward.1} parent=1 // pred_fallthru
      _
    // Predicated region
    $region38: #{rnn_forward.1} parent=1 // pred_check
      _
    $region39: #{rnn_forward.1} parent=1 // pred_check_branch
      %42 = sbr.rel (0) target = $region41
    $region40: #{rnn_forward.1} parent=1 // pred_region
      _
    $region41: #{rnn_forward.1} parent=1 // pred_fallthru
      _
    %v44 = vld [vmem:[%s1] sm:$0xf]
    %v45 = vld [vmem:[%s2] sm:$0xf]
    %v46 = vld [vmem:[%s2 + $0x4] sm:$0xf]
    %v47 = vld [vmem:[%s2 + $0x8] sm:$0xf]
    %v48 = vld [vmem:[%s2 + $0xc] sm:$0xf]
    %v49 = vld [vmem:[%s2 + $0x10] sm:$0xf]
    %v50 = vld [vmem:[%s2 + $0x14] sm:$0xf]
    %v51 = vld [vmem:[%s2 + $0x18] sm:$0xf]
    %v52 = vld [vmem:[%s2 + $0x1c] sm:$0xf]
    %v53 = vld [vmem:[%s4] sm:$0x1]
    %v55 = vlaneseq
    %v56 = vshrl.u32 %v55, 7
    %v57 = vsub.s32 0, %v56
    %v58 = vrot.slane %v53, %v57
    %v68 = vunpack.c.l.b16 %v45
    %v69 = vunpack.c.l.b16 %v46
    %v70 = vunpack.c.l.b16 %v47
    %v71 = vunpack.c.l.b16 %v48
    %v72 = vunpack.c.l.b16 %v49
    %v73 = vunpack.c.l.b16 %v50
    %v74 = vunpack.c.l.b16 %v51
    %v75 = vunpack.c.l.b16 %v52
    %v76 = vpack.c.b16 %v69, %v68
    %v77 = vpack.c.b16 %v71, %v70
    %v78 = vpack.c.b16 %v73, %v72
    %v79 = vpack.c.b16 %v75, %v74
    %vm84 = vcmask 523264
    %v86 = vsel %vm84, %v44, 0
    %88 = vmatprep.subr.bf16.mxu0 0
    %89 = vmatpush1.bf16.msra.mxu0 0
    %90 = vmatprep.subr.bf16.mxu0 0
    %91 = vmatpush1.bf16.msra.mxu0 0
    %92 = vmatprep.subr.bf16.mxu0 0
    %93 = vmatpush1.bf16.msra.mxu0 0
    %94 = vmatprep.subr.bf16.mxu0 0
    %95 = vmatpush1.bf16.msra.mxu0 0
    %96 = vmatprep.subr.bf16.mxu0 0
    %97 = vmatpush1.bf16.msra.mxu0 %v79
    %98 = vmatprep.subr.bf16.mxu0 0
    %99 = vmatpush1.bf16.msra.mxu0 %v78
    %100 = vmatprep.subr.bf16.mxu0 0
    %101 = vmatpush1.bf16.msra.mxu0 %v77
    %102 = vmatprep.subr.bf16.mxu0 0
    %103 = vmatpush1.bf16.msra.mxu0 %v76
    %104 = vmatprep.subr.bf16.mxu0 0
    %105 = vmatpush2.bf16.msra.mxu0 0
    %106 = vmatprep.subr.bf16.mxu0 0
    %107 = vmatpush2.bf16.msra.mxu0 0
    %108 = vmatprep.subr.bf16.mxu0 0
    %109 = vmatpush2.bf16.msra.mxu0 0
    %110 = vmatprep.subr.bf16.mxu0 0
    %111 = vmatpush2.bf16.msra.mxu0 0
    %112 = vmatprep.subr.bf16.mxu0 0
    %113 = vmatpush2.bf16.msra.mxu0 0
    %114 = vmatprep.subr.bf16.mxu0 0
    %115 = vmatpush2.bf16.msra.mxu0 0
    %116 = vmatprep.subr.bf16.mxu0 0
    %117 = vmatpush2.bf16.msra.mxu0 0
    %118 = vmatprep.subr.bf16.mxu0 0
    %119 = vmatpush2.bf16.msra.mxu0 0
    %120 = vmatprep.mubr.bf16.mxu0 0
    %121 = vmatmul.mubr.bf16.gmra.mxu0 %v86
    %v122 = vpop.f32.mrf.mxu0
    %v123 = vadd.f32 %v58, %v122
    %v124 = vpop.f32.mrf.mxu0
    %v125 = vpop.f32.mrf.mxu0
    %v126 = vpop.f32.mrf.mxu0
    %127 = vdwg.mxu0
    %vm128 = vcmask 261120
    %129 = vst.msk [vmem:[#allocation2] sm:$0xff] %vm128, %v123
    %v130 = vld [vmem:[%s3] sm:$0xf]
    %v131 = vld [vmem:[%s3 + $0x4] sm:$0xf]
    %v132 = vld [vmem:[%s3 + $0x8] sm:$0xf]
    %v133 = vld [vmem:[%s3 + $0xc] sm:$0xf]
    %v134 = vld [vmem:[%s5] sm:$0xf]
    %v135 = vld [vmem:[%s5 + $0x4] sm:$0xf]
    %v136 = vld [vmem:[%s5 + $0x8] sm:$0xf]
    %v137 = vld [vmem:[%s5 + $0xc] sm:$0xf]
    %v138 = vld [vmem:[%s5 + $0x10] sm:$0xf]
    %v139 = vld [vmem:[%s5 + $0x14] sm:$0xf]
    %v140 = vld [vmem:[%s5 + $0x18] sm:$0xf]
    %v141 = vld [vmem:[%s5 + $0x1c] sm:$0xf]
    %v142 = vld [vmem:[%s6] sm:$0x1]
    %v144 = vlaneseq
    %v145 = vshrl.u32 %v144, 7
    %v146 = vsub.s32 0, %v145
    %v147 = vrot.slane %v142, %v146
    %v149 = vld [vmem:[%s9] sm:$0x3]
    %v150 = vld [vmem:[%s10] sm:$0x3]
    %s151 = sld [smem:[#allocation4]]
    %s152 = scalar_lea.vmem [#allocation2], %s151
    %v153 = vld [vmem:[%s152] sm:$0x1]
    %s154 = sld [smem:[#allocation4 + $0x80]]
    %s155 = scalar_lea.vmem [#allocation2], %s154
    %v156 = vld [vmem:[%s155] sm:$0x1]
    %v158 = vrot.slane %v156, 7
    %vm160 = vcmask 1040384
    %v161 = vsel %vm160, %v153, %v158
    %v162 = vpack.c.bf16 %v149, %v149
    %v167 = vunpack.c.l.b16 %v130
    %v168 = vunpack.c.l.b16 %v131
    %v169 = vunpack.c.l.b16 %v132
    %v170 = vunpack.c.l.b16 %v133
    %v171 = vpack.c.b16 %v168, %v167
    %v172 = vpack.c.b16 %v170, %v169
    %v176 = vsel %vm128, %v162, 0
    %178 = vmatprep.subr.bf16.mxu0 0
    %179 = vmatpush1.bf16.msra.mxu0 0
    %180 = vmatprep.subr.bf16.mxu0 0
    %181 = vmatpush1.bf16.msra.mxu0 0
    %182 = vmatprep.subr.bf16.mxu0 0
    %183 = vmatpush1.bf16.msra.mxu0 0
    %184 = vmatprep.subr.bf16.mxu0 0
    %185 = vmatpush1.bf16.msra.mxu0 0
    %186 = vmatprep.subr.bf16.mxu0 0
    %187 = vmatpush1.bf16.msra.mxu0 0
    %188 = vmatprep.subr.bf16.mxu0 0
    %189 = vmatpush1.bf16.msra.mxu0 0
    %190 = vmatprep.subr.bf16.mxu0 0
    %191 = vmatpush1.bf16.msra.mxu0 %v172
    %192 = vmatprep.subr.bf16.mxu0 0
    %193 = vmatpush1.bf16.msra.mxu0 %v171
    %194 = vmatprep.subr.bf16.mxu0 0
    %195 = vmatpush2.bf16.msra.mxu0 0
    %196 = vmatprep.subr.bf16.mxu0 0
    %197 = vmatpush2.bf16.msra.mxu0 0
    %198 = vmatprep.subr.bf16.mxu0 0
    %199 = vmatpush2.bf16.msra.mxu0 0
    %200 = vmatprep.subr.bf16.mxu0 0
    %201 = vmatpush2.bf16.msra.mxu0 0
    %202 = vmatprep.subr.bf16.mxu0 0
    %203 = vmatpush2.bf16.msra.mxu0 0
    %204 = vmatprep.subr.bf16.mxu0 0
    %205 = vmatpush2.bf16.msra.mxu0 0
    %206 = vmatprep.subr.bf16.mxu0 0
    %207 = vmatpush2.bf16.msra.mxu0 0
    %208 = vmatprep.subr.bf16.mxu0 0
    %209 = vmatpush2.bf16.msra.mxu0 0
    %210 = vmatprep.mubr.bf16.mxu0 0
    %211 = vmatmul.mubr.bf16.gmra.mxu0 %v176
    %v212 = vpop.f32.mrf.mxu0
    %v213 = vadd.f32 0.0, %v212
    %v214 = vpop.f32.mrf.mxu0
    %v215 = vpop.f32.mrf.mxu0
    %v216 = vpop.f32.mrf.mxu0
    %217 = vdwg.mxu0
    %v218 = vadd.f32 %v161, %v213
    %v219 = vtanh.pop %v218
    %221 = vrot.lane.b32.xlu0 %v150, 32
    %v222 = vpop.permute.xlu0 %221
    %v224 = vsel %vm128, %v219, %v222
    %v225 = vpack.c.bf16 %v224, %v224
    %v234 = vunpack.c.l.b16 %v134
    %v235 = vunpack.c.l.b16 %v135
    %v236 = vunpack.c.l.b16 %v136
    %v237 = vunpack.c.l.b16 %v137
    %v238 = vunpack.c.l.b16 %v138
    %v239 = vunpack.c.l.b16 %v139
    %v240 = vunpack.c.l.b16 %v140
    %v241 = vunpack.c.l.b16 %v141
    %v242 = vpack.c.b16 %v235, %v234
    %v243 = vpack.c.b16 %v237, %v236
    %v244 = vpack.c.b16 %v239, %v238
    %v245 = vpack.c.b16 %v241, %v240
    %v251 = vsel %vm84, %v225, 0
    %253 = vmatprep.subr.bf16.mxu0 0
    %254 = vmatpush1.bf16.msra.mxu0 0
    %255 = vmatprep.subr.bf16.mxu0 0
    %256 = vmatpush1.bf16.msra.mxu0 0
    %257 = vmatprep.subr.bf16.mxu0 0
    %258 = vmatpush1.bf16.msra.mxu0 0
    %259 = vmatprep.subr.bf16.mxu0 0
    %260 = vmatpush1.bf16.msra.mxu0 0
    %261 = vmatprep.subr.bf16.mxu0 0
    %262 = vmatpush1.bf16.msra.mxu0 %v245
    %263 = vmatprep.subr.bf16.mxu0 0
    %264 = vmatpush1.bf16.msra.mxu0 %v244
    %265 = vmatprep.subr.bf16.mxu0 0
    %266 = vmatpush1.bf16.msra.mxu0 %v243
    %267 = vmatprep.subr.bf16.mxu0 0
    %268 = vmatpush1.bf16.msra.mxu0 %v242
    %269 = vmatprep.subr.bf16.mxu0 0
    %270 = vmatpush2.bf16.msra.mxu0 0
    %271 = vmatprep.subr.bf16.mxu0 0
    %272 = vmatpush2.bf16.msra.mxu0 0
    %273 = vmatprep.subr.bf16.mxu0 0
    %274 = vmatpush2.bf16.msra.mxu0 0
    %275 = vmatprep.subr.bf16.mxu0 0
    %276 = vmatpush2.bf16.msra.mxu0 0
    %277 = vmatprep.subr.bf16.mxu0 0
    %278 = vmatpush2.bf16.msra.mxu0 0
    %279 = vmatprep.subr.bf16.mxu0 0
    %280 = vmatpush2.bf16.msra.mxu0 0
    %281 = vmatprep.subr.bf16.mxu0 0
    %282 = vmatpush2.bf16.msra.mxu0 0
    %283 = vmatprep.subr.bf16.mxu0 0
    %284 = vmatpush2.bf16.msra.mxu0 0
    %285 = vmatprep.mubr.bf16.mxu0 0
    %286 = vmatmul.mubr.bf16.gmra.mxu0 %v251
    %v287 = vpop.f32.mrf.mxu0
    %v288 = vadd.f32 %v147, %v287
    %v289 = vpop.f32.mrf.mxu0
    %v290 = vpop.f32.mrf.mxu0
    %v291 = vpop.f32.mrf.mxu0
    %292 = vdwg.mxu0
    %v293 = vtanh.pop %v288
    %s294 = sld [smem:[#allocation4 + $0x1]]
    %s295 = scalar_lea.vmem [#allocation2], %s294
    %v296 = vld [vmem:[%s295] sm:$0x1]
    %s297 = sld [smem:[#allocation4 + $0x81]]
    %s298 = scalar_lea.vmem [#allocation2], %s297
    %v299 = vld [vmem:[%s298] sm:$0x1]
    %v301 = vrot.slane %v299, 7
    %v303 = vsel %vm160, %v296, %v301
    %v304 = vpack.c.bf16 %v219, %v219
    %v306 = vsel %vm128, %v304, 0
    %308 = vmatprep.subr.bf16.mxu0 0
    %309 = vmatpush1.bf16.msra.mxu0 0
    %310 = vmatprep.subr.bf16.mxu0 0
    %311 = vmatpush1.bf16.msra.mxu0 0
    %312 = vmatprep.subr.bf16.mxu0 0
    %313 = vmatpush1.bf16.msra.mxu0 0
    %314 = vmatprep.subr.bf16.mxu0 0
    %315 = vmatpush1.bf16.msra.mxu0 0
    %316 = vmatprep.subr.bf16.mxu0 0
    %317 = vmatpush1.bf16.msra.mxu0 0
    %318 = vmatprep.subr.bf16.mxu0 0
    %319 = vmatpush1.bf16.msra.mxu0 0
    %320 = vmatprep.subr.bf16.mxu0 0
    %321 = vmatpush1.bf16.msra.mxu0 %v172
    %322 = vmatprep.subr.bf16.mxu0 0
    %323 = vmatpush1.bf16.msra.mxu0 %v171
    %324 = vmatprep.subr.bf16.mxu0 0
    %325 = vmatpush2.bf16.msra.mxu0 0
    %326 = vmatprep.subr.bf16.mxu0 0
    %327 = vmatpush2.bf16.msra.mxu0 0
    %328 = vmatprep.subr.bf16.mxu0 0
    %329 = vmatpush2.bf16.msra.mxu0 0
    %330 = vmatprep.subr.bf16.mxu0 0
    %331 = vmatpush2.bf16.msra.mxu0 0
    %332 = vmatprep.subr.bf16.mxu0 0
    %333 = vmatpush2.bf16.msra.mxu0 0
    %334 = vmatprep.subr.bf16.mxu0 0
    %335 = vmatpush2.bf16.msra.mxu0 0
    %336 = vmatprep.subr.bf16.mxu0 0
    %337 = vmatpush2.bf16.msra.mxu0 0
    %338 = vmatprep.subr.bf16.mxu0 0
    %339 = vmatpush2.bf16.msra.mxu0 0
    %340 = vmatprep.mubr.bf16.mxu0 0
    %341 = vmatmul.mubr.bf16.gmra.mxu0 %v306
    %v342 = vpop.f32.mrf.mxu0
    %v343 = vadd.f32 0.0, %v342
    %v344 = vpop.f32.mrf.mxu0
    %v345 = vpop.f32.mrf.mxu0
    %v346 = vpop.f32.mrf.mxu0
    %347 = vdwg.mxu0
    %v348 = vadd.f32 %v303, %v343
    %v349 = vtanh.pop %v348
    %351 = vrot.lane.b32.xlu0 %v293, 32
    %v352 = vpop.permute.xlu0 %351
    %v354 = vsel %vm128, %v349, %v352
    %v355 = vpack.c.bf16 %v354, %v354
    %v357 = vsel %vm84, %v355, 0
    %359 = vmatprep.subr.bf16.mxu0 0
    %360 = vmatpush1.bf16.msra.mxu0 0
    %361 = vmatprep.subr.bf16.mxu0 0
    %362 = vmatpush1.bf16.msra.mxu0 0
    %363 = vmatprep.subr.bf16.mxu0 0
    %364 = vmatpush1.bf16.msra.mxu0 0
    %365 = vmatprep.subr.bf16.mxu0 0
    %366 = vmatpush1.bf16.msra.mxu0 0
    %367 = vmatprep.subr.bf16.mxu0 0
    %368 = vmatpush1.bf16.msra.mxu0 %v245
    %369 = vmatprep.subr.bf16.mxu0 0
    %370 = vmatpush1.bf16.msra.mxu0 %v244
    %371 = vmatprep.subr.bf16.mxu0 0
    %372 = vmatpush1.bf16.msra.mxu0 %v243
    %373 = vmatprep.subr.bf16.mxu0 0
    %374 = vmatpush1.bf16.msra.mxu0 %v242
    %375 = vmatprep.subr.bf16.mxu0 0
    %376 = vmatpush2.bf16.msra.mxu0 0
    %377 = vmatprep.subr.bf16.mxu0 0
    %378 = vmatpush2.bf16.msra.mxu0 0
    %379 = vmatprep.subr.bf16.mxu0 0
    %380 = vmatpush2.bf16.msra.mxu0 0
    %381 = vmatprep.subr.bf16.mxu0 0
    %382 = vmatpush2.bf16.msra.mxu0 0
    %383 = vmatprep.subr.bf16.mxu0 0
    %384 = vmatpush2.bf16.msra.mxu0 0
    %385 = vmatprep.subr.bf16.mxu0 0
    %386 = vmatpush2.bf16.msra.mxu0 0
    %387 = vmatprep.subr.bf16.mxu0 0
    %388 = vmatpush2.bf16.msra.mxu0 0
    %389 = vmatprep.subr.bf16.mxu0 0
    %390 = vmatpush2.bf16.msra.mxu0 0
    %391 = vmatprep.mubr.bf16.mxu0 0
    %392 = vmatmul.mubr.bf16.gmra.mxu0 %v357
    %v393 = vpop.f32.mrf.mxu0
    %v394 = vadd.f32 %v147, %v393
    %v395 = vpop.f32.mrf.mxu0
    %v396 = vpop.f32.mrf.mxu0
    %v397 = vpop.f32.mrf.mxu0
    %398 = vdwg.mxu0
    %v399 = vtanh.pop %v394
    %s400 = sld [smem:[#allocation4 + $0x2]]
    %s401 = scalar_lea.vmem [#allocation2], %s400
    %v402 = vld [vmem:[%s401] sm:$0x1]
    %s403 = sld [smem:[#allocation4 + $0x82]]
    %s404 = scalar_lea.vmem [#allocation2], %s403
    %v405 = vld [vmem:[%s404] sm:$0x1]
    %v407 = vrot.slane %v405, 7
    %v409 = vsel %vm160, %v402, %v407
    %v410 = vpack.c.bf16 %v349, %v349
    %v412 = vsel %vm128, %v410, 0
    %414 = vmatprep.subr.bf16.mxu0 0
    %415 = vmatpush1.bf16.msra.mxu0 0
    %416 = vmatprep.subr.bf16.mxu0 0
    %417 = vmatpush1.bf16.msra.mxu0 0
    %418 = vmatprep.subr.bf16.mxu0 0
    %419 = vmatpush1.bf16.msra.mxu0 0
    %420 = vmatprep.subr.bf16.mxu0 0
    %421 = vmatpush1.bf16.msra.mxu0 0
    %422 = vmatprep.subr.bf16.mxu0 0
    %423 = vmatpush1.bf16.msra.mxu0 0
    %424 = vmatprep.subr.bf16.mxu0 0
    %425 = vmatpush1.bf16.msra.mxu0 0
    %426 = vmatprep.subr.bf16.mxu0 0
    %427 = vmatpush1.bf16.msra.mxu0 %v172
    %428 = vmatprep.subr.bf16.mxu0 0
    %429 = vmatpush1.bf16.msra.mxu0 %v171
    %430 = vmatprep.subr.bf16.mxu0 0
    %431 = vmatpush2.bf16.msra.mxu0 0
    %432 = vmatprep.subr.bf16.mxu0 0
    %433 = vmatpush2.bf16.msra.mxu0 0
    %434 = vmatprep.subr.bf16.mxu0 0
    %435 = vmatpush2.bf16.msra.mxu0 0
    %436 = vmatprep.subr.bf16.mxu0 0
    %437 = vmatpush2.bf16.msra.mxu0 0
    %438 = vmatprep.subr.bf16.mxu0 0
    %439 = vmatpush2.bf16.msra.mxu0 0
    %440 = vmatprep.subr.bf16.mxu0 0
    %441 = vmatpush2.bf16.msra.mxu0 0
    %442 = vmatprep.subr.bf16.mxu0 0
    %443 = vmatpush2.bf16.msra.mxu0 0
    %444 = vmatprep.subr.bf16.mxu0 0
    %445 = vmatpush2.bf16.msra.mxu0 0
    %446 = vmatprep.mubr.bf16.mxu0 0
    %447 = vmatmul.mubr.bf16.gmra.mxu0 %v412
    %v448 = vpop.f32.mrf.mxu0
    %v449 = vadd.f32 0.0, %v448
    %v450 = vpop.f32.mrf.mxu0
    %v451 = vpop.f32.mrf.mxu0
    %v452 = vpop.f32.mrf.mxu0
    %453 = vdwg.mxu0
    %v454 = vadd.f32 %v409, %v449
    %v455 = vtanh.pop %v454
    %457 = vrot.lane.b32.xlu0 %v399, 32
    %v458 = vpop.permute.xlu0 %457
    %v460 = vsel %vm128, %v455, %v458
    %v461 = vpack.c.bf16 %v460, %v460
    %v463 = vsel %vm84, %v461, 0
    %465 = vmatprep.subr.bf16.mxu0 0
    %466 = vmatpush1.bf16.msra.mxu0 0
    %467 = vmatprep.subr.bf16.mxu0 0
    %468 = vmatpush1.bf16.msra.mxu0 0
    %469 = vmatprep.subr.bf16.mxu0 0
    %470 = vmatpush1.bf16.msra.mxu0 0
    %471 = vmatprep.subr.bf16.mxu0 0
    %472 = vmatpush1.bf16.msra.mxu0 0
    %473 = vmatprep.subr.bf16.mxu0 0
    %474 = vmatpush1.bf16.msra.mxu0 %v245
    %475 = vmatprep.subr.bf16.mxu0 0
    %476 = vmatpush1.bf16.msra.mxu0 %v244
    %477 = vmatprep.subr.bf16.mxu0 0
    %478 = vmatpush1.bf16.msra.mxu0 %v243
    %479 = vmatprep.subr.bf16.mxu0 0
    %480 = vmatpush1.bf16.msra.mxu0 %v242
    %481 = vmatprep.subr.bf16.mxu0 0
    %482 = vmatpush2.bf16.msra.mxu0 0
    %483 = vmatprep.subr.bf16.mxu0 0
    %484 = vmatpush2.bf16.msra.mxu0 0
    %485 = vmatprep.subr.bf16.mxu0 0
    %486 = vmatpush2.bf16.msra.mxu0 0
    %487 = vmatprep.subr.bf16.mxu0 0
    %488 = vmatpush2.bf16.msra.mxu0 0
    %489 = vmatprep.subr.bf16.mxu0 0
    %490 = vmatpush2.bf16.msra.mxu0 0
    %491 = vmatprep.subr.bf16.mxu0 0
    %492 = vmatpush2.bf16.msra.mxu0 0
    %493 = vmatprep.subr.bf16.mxu0 0
    %494 = vmatpush2.bf16.msra.mxu0 0
    %495 = vmatprep.subr.bf16.mxu0 0
    %496 = vmatpush2.bf16.msra.mxu0 0
    %497 = vmatprep.mubr.bf16.mxu0 0
    %498 = vmatmul.mubr.bf16.gmra.mxu0 %v463
    %v499 = vpop.f32.mrf.mxu0
    %v500 = vadd.f32 %v147, %v499
    %v501 = vpop.f32.mrf.mxu0
    %v502 = vpop.f32.mrf.mxu0
    %v503 = vpop.f32.mrf.mxu0
    %504 = vdwg.mxu0
    %v505 = vtanh.pop %v500
    %s506 = sld [smem:[#allocation4 + $0x3]]
    %s507 = scalar_lea.vmem [#allocation2], %s506
    %v508 = vld [vmem:[%s507] sm:$0x1]
    %s509 = sld [smem:[#allocation4 + $0x83]]
    %s510 = scalar_lea.vmem [#allocation2], %s509
    %v511 = vld [vmem:[%s510] sm:$0x1]
    %v513 = vrot.slane %v511, 7
    %v515 = vsel %vm160, %v508, %v513
    %v516 = vpack.c.bf16 %v455, %v455
    %v518 = vsel %vm128, %v516, 0
    %520 = vmatprep.subr.bf16.mxu0 0
    %521 = vmatpush1.bf16.msra.mxu0 0
    %522 = vmatprep.subr.bf16.mxu0 0
    %523 = vmatpush1.bf16.msra.mxu0 0
    %524 = vmatprep.subr.bf16.mxu0 0
    %525 = vmatpush1.bf16.msra.mxu0 0
    %526 = vmatprep.subr.bf16.mxu0 0
    %527 = vmatpush1.bf16.msra.mxu0 0
    %528 = vmatprep.subr.bf16.mxu0 0
    %529 = vmatpush1.bf16.msra.mxu0 0
    %530 = vmatprep.subr.bf16.mxu0 0
    %531 = vmatpush1.bf16.msra.mxu0 0
    %532 = vmatprep.subr.bf16.mxu0 0
    %533 = vmatpush1.bf16.msra.mxu0 %v172
    %534 = vmatprep.subr.bf16.mxu0 0
    %535 = vmatpush1.bf16.msra.mxu0 %v171
    %536 = vmatprep.subr.bf16.mxu0 0
    %537 = vmatpush2.bf16.msra.mxu0 0
    %538 = vmatprep.subr.bf16.mxu0 0
    %539 = vmatpush2.bf16.msra.mxu0 0
    %540 = vmatprep.subr.bf16.mxu0 0
    %541 = vmatpush2.bf16.msra.mxu0 0
    %542 = vmatprep.subr.bf16.mxu0 0
    %543 = vmatpush2.bf16.msra.mxu0 0
    %544 = vmatprep.subr.bf16.mxu0 0
    %545 = vmatpush2.bf16.msra.mxu0 0
    %546 = vmatprep.subr.bf16.mxu0 0
    %547 = vmatpush2.bf16.msra.mxu0 0
    %548 = vmatprep.subr.bf16.mxu0 0
    %549 = vmatpush2.bf16.msra.mxu0 0
    %550 = vmatprep.subr.bf16.mxu0 0
    %551 = vmatpush2.bf16.msra.mxu0 0
    %552 = vmatprep.mubr.bf16.mxu0 0
    %553 = vmatmul.mubr.bf16.gmra.mxu0 %v518
    %v554 = vpop.f32.mrf.mxu0
    %v555 = vadd.f32 0.0, %v554
    %v556 = vpop.f32.mrf.mxu0
    %v557 = vpop.f32.mrf.mxu0
    %v558 = vpop.f32.mrf.mxu0
    %559 = vdwg.mxu0
    %v560 = vadd.f32 %v515, %v555
    %v561 = vtanh.pop %v560
    %563 = vrot.lane.b32.xlu0 %v505, 32
    %v564 = vpop.permute.xlu0 %563
    %v566 = vsel %vm128, %v561, %v564
    %v567 = vpack.c.bf16 %v566, %v566
    %v569 = vsel %vm84, %v567, 0
    %571 = vmatprep.subr.bf16.mxu0 0
    %572 = vmatpush1.bf16.msra.mxu0 0
    %573 = vmatprep.subr.bf16.mxu0 0
    %574 = vmatpush1.bf16.msra.mxu0 0
    %575 = vmatprep.subr.bf16.mxu0 0
    %576 = vmatpush1.bf16.msra.mxu0 0
    %577 = vmatprep.subr.bf16.mxu0 0
    %578 = vmatpush1.bf16.msra.mxu0 0
    %579 = vmatprep.subr.bf16.mxu0 0
    %580 = vmatpush1.bf16.msra.mxu0 %v245
    %581 = vmatprep.subr.bf16.mxu0 0
    %582 = vmatpush1.bf16.msra.mxu0 %v244
    %583 = vmatprep.subr.bf16.mxu0 0
    %584 = vmatpush1.bf16.msra.mxu0 %v243
    %585 = vmatprep.subr.bf16.mxu0 0
    %586 = vmatpush1.bf16.msra.mxu0 %v242
    %587 = vmatprep.subr.bf16.mxu0 0
    %588 = vmatpush2.bf16.msra.mxu0 0
    %589 = vmatprep.subr.bf16.mxu0 0
    %590 = vmatpush2.bf16.msra.mxu0 0
    %591 = vmatprep.subr.bf16.mxu0 0
    %592 = vmatpush2.bf16.msra.mxu0 0
    %593 = vmatprep.subr.bf16.mxu0 0
    %594 = vmatpush2.bf16.msra.mxu0 0
    %595 = vmatprep.subr.bf16.mxu0 0
    %596 = vmatpush2.bf16.msra.mxu0 0
    %597 = vmatprep.subr.bf16.mxu0 0
    %598 = vmatpush2.bf16.msra.mxu0 0
    %599 = vmatprep.subr.bf16.mxu0 0
    %600 = vmatpush2.bf16.msra.mxu0 0
    %601 = vmatprep.subr.bf16.mxu0 0
    %602 = vmatpush2.bf16.msra.mxu0 0
    %603 = vmatprep.mubr.bf16.mxu0 0
    %604 = vmatmul.mubr.bf16.gmra.mxu0 %v569
    %v605 = vpop.f32.mrf.mxu0
    %v606 = vadd.f32 %v147, %v605
    %v607 = vpop.f32.mrf.mxu0
    %v608 = vpop.f32.mrf.mxu0
    %v609 = vpop.f32.mrf.mxu0
    %610 = vdwg.mxu0
    %v611 = vtanh.pop %v606
    %s612 = sld [smem:[#allocation4 + $0x4]]
    %s613 = scalar_lea.vmem [#allocation2], %s612
    %v614 = vld [vmem:[%s613] sm:$0x1]
    %s615 = sld [smem:[#allocation4 + $0x84]]
    %s616 = scalar_lea.vmem [#allocation2], %s615
    %v617 = vld [vmem:[%s616] sm:$0x1]
    %v619 = vrot.slane %v617, 7
    %v621 = vsel %vm160, %v614, %v619
    %v622 = vpack.c.bf16 %v561, %v561
    %v624 = vsel %vm128, %v622, 0
    %626 = vmatprep.subr.bf16.mxu0 0
    %627 = vmatpush1.bf16.msra.mxu0 0
    %628 = vmatprep.subr.bf16.mxu0 0
    %629 = vmatpush1.bf16.msra.mxu0 0
    %630 = vmatprep.subr.bf16.mxu0 0
    %631 = vmatpush1.bf16.msra.mxu0 0
    %632 = vmatprep.subr.bf16.mxu0 0
    %633 = vmatpush1.bf16.msra.mxu0 0
    %634 = vmatprep.subr.bf16.mxu0 0
    %635 = vmatpush1.bf16.msra.mxu0 0
    %636 = vmatprep.subr.bf16.mxu0 0
    %637 = vmatpush1.bf16.msra.mxu0 0
    %638 = vmatprep.subr.bf16.mxu0 0
    %639 = vmatpush1.bf16.msra.mxu0 %v172
    %640 = vmatprep.subr.bf16.mxu0 0
    %641 = vmatpush1.bf16.msra.mxu0 %v171
    %642 = vmatprep.subr.bf16.mxu0 0
    %643 = vmatpush2.bf16.msra.mxu0 0
    %644 = vmatprep.subr.bf16.mxu0 0
    %645 = vmatpush2.bf16.msra.mxu0 0
    %646 = vmatprep.subr.bf16.mxu0 0
    %647 = vmatpush2.bf16.msra.mxu0 0
    %648 = vmatprep.subr.bf16.mxu0 0
    %649 = vmatpush2.bf16.msra.mxu0 0
    %650 = vmatprep.subr.bf16.mxu0 0
    %651 = vmatpush2.bf16.msra.mxu0 0
    %652 = vmatprep.subr.bf16.mxu0 0
    %653 = vmatpush2.bf16.msra.mxu0 0
    %654 = vmatprep.subr.bf16.mxu0 0
    %655 = vmatpush2.bf16.msra.mxu0 0
    %656 = vmatprep.subr.bf16.mxu0 0
    %657 = vmatpush2.bf16.msra.mxu0 0
    %658 = vmatprep.mubr.bf16.mxu0 0
    %659 = vmatmul.mubr.bf16.gmra.mxu0 %v624
    %v660 = vpop.f32.mrf.mxu0
    %v661 = vadd.f32 0.0, %v660
    %v662 = vpop.f32.mrf.mxu0
    %v663 = vpop.f32.mrf.mxu0
    %v664 = vpop.f32.mrf.mxu0
    %665 = vdwg.mxu0
    %v666 = vadd.f32 %v621, %v661
    %v667 = vtanh.pop %v666
    %669 = vrot.lane.b32.xlu0 %v611, 32
    %v670 = vpop.permute.xlu0 %669
    %v672 = vsel %vm128, %v667, %v670
    %v673 = vpack.c.bf16 %v672, %v672
    %v675 = vsel %vm84, %v673, 0
    %677 = vmatprep.subr.bf16.mxu0 0
    %678 = vmatpush1.bf16.msra.mxu0 0
    %679 = vmatprep.subr.bf16.mxu0 0
    %680 = vmatpush1.bf16.msra.mxu0 0
    %681 = vmatprep.subr.bf16.mxu0 0
    %682 = vmatpush1.bf16.msra.mxu0 0
    %683 = vmatprep.subr.bf16.mxu0 0
    %684 = vmatpush1.bf16.msra.mxu0 0
    %685 = vmatprep.subr.bf16.mxu0 0
    %686 = vmatpush1.bf16.msra.mxu0 %v245
    %687 = vmatprep.subr.bf16.mxu0 0
    %688 = vmatpush1.bf16.msra.mxu0 %v244
    %689 = vmatprep.subr.bf16.mxu0 0
    %690 = vmatpush1.bf16.msra.mxu0 %v243
    %691 = vmatprep.subr.bf16.mxu0 0
    %692 = vmatpush1.bf16.msra.mxu0 %v242
    %693 = vmatprep.subr.bf16.mxu0 0
    %694 = vmatpush2.bf16.msra.mxu0 0
    %695 = vmatprep.subr.bf16.mxu0 0
    %696 = vmatpush2.bf16.msra.mxu0 0
    %697 = vmatprep.subr.bf16.mxu0 0
    %698 = vmatpush2.bf16.msra.mxu0 0
    %699 = vmatprep.subr.bf16.mxu0 0
    %700 = vmatpush2.bf16.msra.mxu0 0
    %701 = vmatprep.subr.bf16.mxu0 0
    %702 = vmatpush2.bf16.msra.mxu0 0
    %703 = vmatprep.subr.bf16.mxu0 0
    %704 = vmatpush2.bf16.msra.mxu0 0
    %705 = vmatprep.subr.bf16.mxu0 0
    %706 = vmatpush2.bf16.msra.mxu0 0
    %707 = vmatprep.subr.bf16.mxu0 0
    %708 = vmatpush2.bf16.msra.mxu0 0
    %709 = vmatprep.mubr.bf16.mxu0 0
    %710 = vmatmul.mubr.bf16.gmra.mxu0 %v675
    %v711 = vpop.f32.mrf.mxu0
    %v712 = vadd.f32 %v147, %v711
    %v713 = vpop.f32.mrf.mxu0
    %v714 = vpop.f32.mrf.mxu0
    %v715 = vpop.f32.mrf.mxu0
    %716 = vdwg.mxu0
    %v717 = vtanh.pop %v712
    %s718 = sld [smem:[#allocation4 + $0x5]]
    %s719 = scalar_lea.vmem [#allocation2], %s718
    %v720 = vld [vmem:[%s719] sm:$0x1]
    %s721 = sld [smem:[#allocation4 + $0x85]]
    %s722 = scalar_lea.vmem [#allocation2], %s721
    %v723 = vld [vmem:[%s722] sm:$0x1]
    %v725 = vrot.slane %v723, 7
    %v727 = vsel %vm160, %v720, %v725
    %v728 = vpack.c.bf16 %v667, %v667
    %v730 = vsel %vm128, %v728, 0
    %732 = vmatprep.subr.bf16.mxu0 0
    %733 = vmatpush1.bf16.msra.mxu0 0
    %734 = vmatprep.subr.bf16.mxu0 0
    %735 = vmatpush1.bf16.msra.mxu0 0
    %736 = vmatprep.subr.bf16.mxu0 0
    %737 = vmatpush1.bf16.msra.mxu0 0
    %738 = vmatprep.subr.bf16.mxu0 0
    %739 = vmatpush1.bf16.msra.mxu0 0
    %740 = vmatprep.subr.bf16.mxu0 0
    %741 = vmatpush1.bf16.msra.mxu0 0
    %742 = vmatprep.subr.bf16.mxu0 0
    %743 = vmatpush1.bf16.msra.mxu0 0
    %744 = vmatprep.subr.bf16.mxu0 0
    %745 = vmatpush1.bf16.msra.mxu0 %v172
    %746 = vmatprep.subr.bf16.mxu0 0
    %747 = vmatpush1.bf16.msra.mxu0 %v171
    %748 = vmatprep.subr.bf16.mxu0 0
    %749 = vmatpush2.bf16.msra.mxu0 0
    %750 = vmatprep.subr.bf16.mxu0 0
    %751 = vmatpush2.bf16.msra.mxu0 0
    %752 = vmatprep.subr.bf16.mxu0 0
    %753 = vmatpush2.bf16.msra.mxu0 0
    %754 = vmatprep.subr.bf16.mxu0 0
    %755 = vmatpush2.bf16.msra.mxu0 0
    %756 = vmatprep.subr.bf16.mxu0 0
    %757 = vmatpush2.bf16.msra.mxu0 0
    %758 = vmatprep.subr.bf16.mxu0 0
    %759 = vmatpush2.bf16.msra.mxu0 0
    %760 = vmatprep.subr.bf16.mxu0 0
    %761 = vmatpush2.bf16.msra.mxu0 0
    %762 = vmatprep.subr.bf16.mxu0 0
    %763 = vmatpush2.bf16.msra.mxu0 0
    %764 = vmatprep.mubr.bf16.mxu0 0
    %765 = vmatmul.mubr.bf16.gmra.mxu0 %v730
    %v766 = vpop.f32.mrf.mxu0
    %v767 = vadd.f32 0.0, %v766
    %v768 = vpop.f32.mrf.mxu0
    %v769 = vpop.f32.mrf.mxu0
    %v770 = vpop.f32.mrf.mxu0
    %771 = vdwg.mxu0
    %v772 = vadd.f32 %v727, %v767
    %v773 = vtanh.pop %v772
    %775 = vrot.lane.b32.xlu0 %v717, 32
    %v776 = vpop.permute.xlu0 %775
    %v778 = vsel %vm128, %v773, %v776
    %v779 = vpack.c.bf16 %v778, %v778
    %v781 = vsel %vm84, %v779, 0
    %783 = vmatprep.subr.bf16.mxu0 0
    %784 = vmatpush1.bf16.msra.mxu0 0
    %785 = vmatprep.subr.bf16.mxu0 0
    %786 = vmatpush1.bf16.msra.mxu0 0
    %787 = vmatprep.subr.bf16.mxu0 0
    %788 = vmatpush1.bf16.msra.mxu0 0
    %789 = vmatprep.subr.bf16.mxu0 0
    %790 = vmatpush1.bf16.msra.mxu0 0
    %791 = vmatprep.subr.bf16.mxu0 0
    %792 = vmatpush1.bf16.msra.mxu0 %v245
    %793 = vmatprep.subr.bf16.mxu0 0
    %794 = vmatpush1.bf16.msra.mxu0 %v244
    %795 = vmatprep.subr.bf16.mxu0 0
    %796 = vmatpush1.bf16.msra.mxu0 %v243
    %797 = vmatprep.subr.bf16.mxu0 0
    %798 = vmatpush1.bf16.msra.mxu0 %v242
    %799 = vmatprep.subr.bf16.mxu0 0
    %800 = vmatpush2.bf16.msra.mxu0 0
    %801 = vmatprep.subr.bf16.mxu0 0
    %802 = vmatpush2.bf16.msra.mxu0 0
    %803 = vmatprep.subr.bf16.mxu0 0
    %804 = vmatpush2.bf16.msra.mxu0 0
    %805 = vmatprep.subr.bf16.mxu0 0
    %806 = vmatpush2.bf16.msra.mxu0 0
    %807 = vmatprep.subr.bf16.mxu0 0
    %808 = vmatpush2.bf16.msra.mxu0 0
    %809 = vmatprep.subr.bf16.mxu0 0
    %810 = vmatpush2.bf16.msra.mxu0 0
    %811 = vmatprep.subr.bf16.mxu0 0
    %812 = vmatpush2.bf16.msra.mxu0 0
    %813 = vmatprep.subr.bf16.mxu0 0
    %814 = vmatpush2.bf16.msra.mxu0 0
    %815 = vmatprep.mubr.bf16.mxu0 0
    %816 = vmatmul.mubr.bf16.gmra.mxu0 %v781
    %v817 = vpop.f32.mrf.mxu0
    %v818 = vadd.f32 %v147, %v817
    %v819 = vpop.f32.mrf.mxu0
    %v820 = vpop.f32.mrf.mxu0
    %v821 = vpop.f32.mrf.mxu0
    %822 = vdwg.mxu0
    %v823 = vtanh.pop %v818
    %s824 = sld [smem:[#allocation4 + $0x6]]
    %s825 = scalar_lea.vmem [#allocation2], %s824
    %v826 = vld [vmem:[%s825] sm:$0x1]
    %s827 = sld [smem:[#allocation4 + $0x86]]
    %s828 = scalar_lea.vmem [#allocation2], %s827
    %v829 = vld [vmem:[%s828] sm:$0x1]
    %v831 = vrot.slane %v829, 7
    %v833 = vsel %vm160, %v826, %v831
    %v834 = vpack.c.bf16 %v773, %v773
    %v836 = vsel %vm128, %v834, 0
    %838 = vmatprep.subr.bf16.mxu0 0
    %839 = vmatpush1.bf16.msra.mxu0 0
    %840 = vmatprep.subr.bf16.mxu0 0
    %841 = vmatpush1.bf16.msra.mxu0 0
    %842 = vmatprep.subr.bf16.mxu0 0
    %843 = vmatpush1.bf16.msra.mxu0 0
    %844 = vmatprep.subr.bf16.mxu0 0
    %845 = vmatpush1.bf16.msra.mxu0 0
    %846 = vmatprep.subr.bf16.mxu0 0
    %847 = vmatpush1.bf16.msra.mxu0 0
    %848 = vmatprep.subr.bf16.mxu0 0
    %849 = vmatpush1.bf16.msra.mxu0 0
    %850 = vmatprep.subr.bf16.mxu0 0
    %851 = vmatpush1.bf16.msra.mxu0 %v172
    %852 = vmatprep.subr.bf16.mxu0 0
    %853 = vmatpush1.bf16.msra.mxu0 %v171
    %854 = vmatprep.subr.bf16.mxu0 0
    %855 = vmatpush2.bf16.msra.mxu0 0
    %856 = vmatprep.subr.bf16.mxu0 0
    %857 = vmatpush2.bf16.msra.mxu0 0
    %858 = vmatprep.subr.bf16.mxu0 0
    %859 = vmatpush2.bf16.msra.mxu0 0
    %860 = vmatprep.subr.bf16.mxu0 0
    %861 = vmatpush2.bf16.msra.mxu0 0
    %862 = vmatprep.subr.bf16.mxu0 0
    %863 = vmatpush2.bf16.msra.mxu0 0
    %864 = vmatprep.subr.bf16.mxu0 0
    %865 = vmatpush2.bf16.msra.mxu0 0
    %866 = vmatprep.subr.bf16.mxu0 0
    %867 = vmatpush2.bf16.msra.mxu0 0
    %868 = vmatprep.subr.bf16.mxu0 0
    %869 = vmatpush2.bf16.msra.mxu0 0
    %870 = vmatprep.mubr.bf16.mxu0 0
    %871 = vmatmul.mubr.bf16.gmra.mxu0 %v836
    %v872 = vpop.f32.mrf.mxu0
    %v873 = vadd.f32 0.0, %v872
    %v874 = vpop.f32.mrf.mxu0
    %v875 = vpop.f32.mrf.mxu0
    %v876 = vpop.f32.mrf.mxu0
    %877 = vdwg.mxu0
    %v878 = vadd.f32 %v833, %v873
    %v879 = vtanh.pop %v878
    %881 = vrot.lane.b32.xlu0 %v823, 32
    %v882 = vpop.permute.xlu0 %881
    %v884 = vsel %vm128, %v879, %v882
    %v885 = vpack.c.bf16 %v884, %v884
    %v887 = vsel %vm84, %v885, 0
    %889 = vmatprep.subr.bf16.mxu0 0
    %890 = vmatpush1.bf16.msra.mxu0 0
    %891 = vmatprep.subr.bf16.mxu0 0
    %892 = vmatpush1.bf16.msra.mxu0 0
    %893 = vmatprep.subr.bf16.mxu0 0
    %894 = vmatpush1.bf16.msra.mxu0 0
    %895 = vmatprep.subr.bf16.mxu0 0
    %896 = vmatpush1.bf16.msra.mxu0 0
    %897 = vmatprep.subr.bf16.mxu0 0
    %898 = vmatpush1.bf16.msra.mxu0 %v245
    %899 = vmatprep.subr.bf16.mxu0 0
    %900 = vmatpush1.bf16.msra.mxu0 %v244
    %901 = vmatprep.subr.bf16.mxu0 0
    %902 = vmatpush1.bf16.msra.mxu0 %v243
    %903 = vmatprep.subr.bf16.mxu0 0
    %904 = vmatpush1.bf16.msra.mxu0 %v242
    %905 = vmatprep.subr.bf16.mxu0 0
    %906 = vmatpush2.bf16.msra.mxu0 0
    %907 = vmatprep.subr.bf16.mxu0 0
    %908 = vmatpush2.bf16.msra.mxu0 0
    %909 = vmatprep.subr.bf16.mxu0 0
    %910 = vmatpush2.bf16.msra.mxu0 0
    %911 = vmatprep.subr.bf16.mxu0 0
    %912 = vmatpush2.bf16.msra.mxu0 0
    %913 = vmatprep.subr.bf16.mxu0 0
    %914 = vmatpush2.bf16.msra.mxu0 0
    %915 = vmatprep.subr.bf16.mxu0 0
    %916 = vmatpush2.bf16.msra.mxu0 0
    %917 = vmatprep.subr.bf16.mxu0 0
    %918 = vmatpush2.bf16.msra.mxu0 0
    %919 = vmatprep.subr.bf16.mxu0 0
    %920 = vmatpush2.bf16.msra.mxu0 0
    %921 = vmatprep.mubr.bf16.mxu0 0
    %922 = vmatmul.mubr.bf16.gmra.mxu0 %v887
    %v923 = vpop.f32.mrf.mxu0
    %v924 = vadd.f32 %v147, %v923
    %v925 = vpop.f32.mrf.mxu0
    %v926 = vpop.f32.mrf.mxu0
    %v927 = vpop.f32.mrf.mxu0
    %928 = vdwg.mxu0
    %v929 = vtanh.pop %v924
    %s930 = sld [smem:[#allocation4 + $0x7]]
    %s931 = scalar_lea.vmem [#allocation2], %s930
    %v932 = vld [vmem:[%s931] sm:$0x1]
    %s933 = sld [smem:[#allocation4 + $0x87]]
    %s934 = scalar_lea.vmem [#allocation2], %s933
    %v935 = vld [vmem:[%s934] sm:$0x1]
    %v937 = vrot.slane %v935, 7
    %v939 = vsel %vm160, %v932, %v937
    %v940 = vpack.c.bf16 %v879, %v879
    %v942 = vsel %vm128, %v940, 0
    %944 = vmatprep.subr.bf16.mxu0 0
    %945 = vmatpush1.bf16.msra.mxu0 0
    %946 = vmatprep.subr.bf16.mxu0 0
    %947 = vmatpush1.bf16.msra.mxu0 0
    %948 = vmatprep.subr.bf16.mxu0 0
    %949 = vmatpush1.bf16.msra.mxu0 0
    %950 = vmatprep.subr.bf16.mxu0 0
    %951 = vmatpush1.bf16.msra.mxu0 0
    %952 = vmatprep.subr.bf16.mxu0 0
    %953 = vmatpush1.bf16.msra.mxu0 0
    %954 = vmatprep.subr.bf16.mxu0 0
    %955 = vmatpush1.bf16.msra.mxu0 0
    %956 = vmatprep.subr.bf16.mxu0 0
    %957 = vmatpush1.bf16.msra.mxu0 %v172
    %958 = vmatprep.subr.bf16.mxu0 0
    %959 = vmatpush1.bf16.msra.mxu0 %v171
    %960 = vmatprep.subr.bf16.mxu0 0
    %961 = vmatpush2.bf16.msra.mxu0 0
    %962 = vmatprep.subr.bf16.mxu0 0
    %963 = vmatpush2.bf16.msra.mxu0 0
    %964 = vmatprep.subr.bf16.mxu0 0
    %965 = vmatpush2.bf16.msra.mxu0 0
    %966 = vmatprep.subr.bf16.mxu0 0
    %967 = vmatpush2.bf16.msra.mxu0 0
    %968 = vmatprep.subr.bf16.mxu0 0
    %969 = vmatpush2.bf16.msra.mxu0 0
    %970 = vmatprep.subr.bf16.mxu0 0
    %971 = vmatpush2.bf16.msra.mxu0 0
    %972 = vmatprep.subr.bf16.mxu0 0
    %973 = vmatpush2.bf16.msra.mxu0 0
    %974 = vmatprep.subr.bf16.mxu0 0
    %975 = vmatpush2.bf16.msra.mxu0 0
    %976 = vmatprep.mubr.bf16.mxu0 0
    %977 = vmatmul.mubr.bf16.gmra.mxu0 %v942
    %v978 = vpop.f32.mrf.mxu0
    %v979 = vadd.f32 0.0, %v978
    %v980 = vpop.f32.mrf.mxu0
    %v981 = vpop.f32.mrf.mxu0
    %v982 = vpop.f32.mrf.mxu0
    %983 = vdwg.mxu0
    %v984 = vadd.f32 %v939, %v979
    %v985 = vtanh.pop %v984
    %987 = vrot.lane.b32.xlu0 %v929, 32
    %v988 = vpop.permute.xlu0 %987
    %v990 = vsel %vm128, %v985, %v988
    %v991 = vpack.c.bf16 %v990, %v990
    %v993 = vsel %vm84, %v991, 0
    %995 = vmatprep.subr.bf16.mxu0 0
    %996 = vmatpush1.bf16.msra.mxu0 0
    %997 = vmatprep.subr.bf16.mxu0 0
    %998 = vmatpush1.bf16.msra.mxu0 0
    %999 = vmatprep.subr.bf16.mxu0 0
    %1000 = vmatpush1.bf16.msra.mxu0 0
    %1001 = vmatprep.subr.bf16.mxu0 0
    %1002 = vmatpush1.bf16.msra.mxu0 0
    %1003 = vmatprep.subr.bf16.mxu0 0
    %1004 = vmatpush1.bf16.msra.mxu0 %v245
    %1005 = vmatprep.subr.bf16.mxu0 0
    %1006 = vmatpush1.bf16.msra.mxu0 %v244
    %1007 = vmatprep.subr.bf16.mxu0 0
    %1008 = vmatpush1.bf16.msra.mxu0 %v243
    %1009 = vmatprep.subr.bf16.mxu0 0
    %1010 = vmatpush1.bf16.msra.mxu0 %v242
    %1011 = vmatprep.subr.bf16.mxu0 0
    %1012 = vmatpush2.bf16.msra.mxu0 0
    %1013 = vmatprep.subr.bf16.mxu0 0
    %1014 = vmatpush2.bf16.msra.mxu0 0
    %1015 = vmatprep.subr.bf16.mxu0 0
    %1016 = vmatpush2.bf16.msra.mxu0 0
    %1017 = vmatprep.subr.bf16.mxu0 0
    %1018 = vmatpush2.bf16.msra.mxu0 0
    %1019 = vmatprep.subr.bf16.mxu0 0
    %1020 = vmatpush2.bf16.msra.mxu0 0
    %1021 = vmatprep.subr.bf16.mxu0 0
    %1022 = vmatpush2.bf16.msra.mxu0 0
    %1023 = vmatprep.subr.bf16.mxu0 0
    %1024 = vmatpush2.bf16.msra.mxu0 0
    %1025 = vmatprep.subr.bf16.mxu0 0
    %1026 = vmatpush2.bf16.msra.mxu0 0
    %1027 = vmatprep.mubr.bf16.mxu0 0
    %1028 = vmatmul.mubr.bf16.gmra.mxu0 %v993
    %v1029 = vpop.f32.mrf.mxu0
    %v1030 = vadd.f32 %v147, %v1029
    %v1031 = vpop.f32.mrf.mxu0
    %v1032 = vpop.f32.mrf.mxu0
    %v1033 = vpop.f32.mrf.mxu0
    %1034 = vdwg.mxu0
    %v1035 = vtanh.pop %v1030
    %1036 = vrot.lane.b32.xlu0 %v505, 64
    %v1037 = vpop.permute.xlu0 %1036
    %1039 = vrot.lane.b32.xlu0 %v611, 96
    %v1040 = vpop.permute.xlu0 %1039
    %1042 = vrot.lane.b32.xlu0 %v929, 64
    %v1043 = vpop.permute.xlu0 %1042
    %1046 = vrot.lane.b32.xlu0 %v1035, 96
    %v1047 = vpop.permute.xlu0 %1046
    %v1049 = vsel %vm128, %v293, %v458
    %v1050 = vsel %vm84, %v1049, %v1037
    %vm1051 = vcmask 785408
    %v1052 = vsel %vm1051, %v1050, %v1040
    %v1053 = vsel %vm128, %v717, %v882
    %v1054 = vsel %vm84, %v1053, %v1043
    %v1055 = vsel %vm1051, %v1054, %v1047
    %v1056 = vpack.c.bf16 %v1052, %v1052
    %v1057 = vpack.c.bf16 %v1055, %v1055
    %v1058 = vld [vmem:[%s7] sm:$0xff]
    %v1059 = vld [vmem:[%s7 + $0x8] sm:$0x11]
    %v1060 = vld [vmem:[%s8] sm:$0x1]
    %v1062 = vlaneseq
    %v1063 = vshrl.u32 %v1062, 7
    %v1064 = vsub.s32 0, %v1063
    %v1065 = vrot.slane %v1060, %v1064
    %v1069 = vunpack.c.l.b16 %v1058
    %v1070 = vunpack.c.h.b16 %v1058
    %v1071 = vunpack.c.l.b16 %v1059
    %v1072 = vunpack.c.h.b16 %v1059
    %v1073 = vpack.c.b16 %v1071, %v1069
    %v1074 = vpack.c.b16 %v1072, %v1070
    %1077 = vmatprep.subr.bf16.mxu0 0
    %1078 = vmatpush1.bf16.xpose.msra.mxu0 0
    %1079 = vmatprep.subr.bf16.mxu0 0
    %1080 = vmatpush1.bf16.xpose.msra.mxu0 0
    %1081 = vmatprep.subr.bf16.mxu0 0
    %1082 = vmatpush1.bf16.xpose.msra.mxu0 0
    %1083 = vmatprep.subr.bf16.mxu0 0
    %1084 = vmatpush1.bf16.xpose.msra.mxu0 0
    %1085 = vmatprep.subr.bf16.mxu0 0
    %1086 = vmatpush1.bf16.xpose.msra.mxu0 0
    %1087 = vmatprep.subr.bf16.mxu0 0
    %1088 = vmatpush1.bf16.xpose.msra.mxu0 0
    %1089 = vmatprep.subr.bf16.mxu0 0
    %1090 = vmatpush1.bf16.xpose.msra.mxu0 0
    %1091 = vmatprep.subr.bf16.mxu0 %v1074
    %1092 = vmatpush1.bf16.xpose.msra.mxu0 %v1073
    %1093 = vmatprep.subr.bf16.mxu0 0
    %1094 = vmatpush2.bf16.xpose.msra.mxu0 0
    %1095 = vmatprep.subr.bf16.mxu0 0
    %1096 = vmatpush2.bf16.xpose.msra.mxu0 0
    %1097 = vmatprep.subr.bf16.mxu0 0
    %1098 = vmatpush2.bf16.xpose.msra.mxu0 0
    %1099 = vmatprep.subr.bf16.mxu0 0
    %1100 = vmatpush2.bf16.xpose.msra.mxu0 0
    %1101 = vmatprep.subr.bf16.mxu0 0
    %1102 = vmatpush2.bf16.xpose.msra.mxu0 0
    %1103 = vmatprep.subr.bf16.mxu0 0
    %1104 = vmatpush2.bf16.xpose.msra.mxu0 0
    %1105 = vmatprep.subr.bf16.mxu0 0
    %1106 = vmatpush2.bf16.xpose.msra.mxu0 0
    %1107 = vmatprep.subr.bf16.mxu0 0
    %1108 = vmatpush2.bf16.xpose.msra.mxu0 0
    %1109 = vmatprep.mubr.bf16.mxu0 %v1057
    %1110 = vmatmul.mubr.bf16.gmra.mxu0 %v1056
    %v1111 = vpop.f32.mrf.mxu0
    %v1112 = vadd.f32 %v1065, %v1111
    %v1113 = vpop.f32.mrf.mxu0
    %v1114 = vpop.f32.mrf.mxu0
    %v1115 = vpop.f32.mrf.mxu0
    %1116 = vdwg.mxu0
    %v1117 = vtanh.pop %v1112
    %vm1118 = vcmask 74752
    %1119 = vst.msk [vmem:[#allocation5] sm:$0x3] %vm1118, %v1117
    // Predicated region
    $region42: #{rnn_forward.1} parent=1 // pred_check
      _
    $region43: #{rnn_forward.1} parent=1 // pred_check_branch
      %1121 = sbr.rel (0) target = $region45
    $region44: #{rnn_forward.1} parent=1 // pred_region
      %s1123 = ssub.s32 32, 32
      %1124 = vsyncadd [#allocation6], %s1123
      %s1126 = sshll.u32 [#allocation5], 4
      %s1127 = int_to_ptr.vmem [resolvable:$true] %s1126
      %1129 = dma.vmem_to_hbm [thread:$0]  %s1127, 32, %s11, [#allocation6]
    $region45: #{rnn_forward.1} parent=1 // pred_fallthru
      _
    // Predicated region
    $region46: #{rnn_forward.1} parent=1 // pred_check
      _
    $region47: #{rnn_forward.1} parent=1 // pred_check_branch
      %1131 = sbr.rel (0) target = $region49
    $region48: #{rnn_forward.1} parent=1 // pred_region
      %1132 = dma.done [#allocation6], 32
    $region49: #{rnn_forward.1} parent=1 // pred_fallthru
      _
    %1133 = vsyncpa [#allocation6], 1

</llo_original>
